<compile_context>
chip_gen: v7x
topology: tpu7x:2x2x1
jax: 0.10.0
libtpu: 0.0.40
codegen_flags: <defaults>
</compile_context>

<pallas_src>
import functools

import jax
import jax.numpy as jnp
from jax.experimental import pallas as pl
from jax.experimental.pallas import tpu as pltpu


def _round_up(x, m):
    return (x + m - 1) // m * m


# ---------------------------------------------------------------------------
# Pallas kernel: processes `bblk` batch elements per grid step.
# ---------------------------------------------------------------------------
def _wavenet_kernel(x_ref, wstart_ref, wd_ref, bd_ref, wr_ref, br_ref,
                    ws_ref, bs_ref, wout_ref, wend_ref, out_ref,
                    *, dilations, n_res, decode_len, bblk, mxu_dtype):
    f32 = jnp.float32
    T = x_ref.shape[1]
    L = len(dilations)
    tail_start = T - decode_len
    # hoisted causal zero block, sliced per layer (avoid per-layer zeros ctor)
    zeros_shift = jnp.zeros((max(dilations), n_res), f32)

    for bb in range(bblk):
        # conv_start: 1x1 conv, no bias -> (T, R), f32 accumulation
        h = jnp.dot(x_ref[bb].astype(mxu_dtype), wstart_ref[...],
                    preferred_element_type=f32)

        z_tails = []
        for l, d in enumerate(dilations):
            # causal dilated conv (k=2): y[t] = W0 @ h[t-d] + W1 @ h[t] + b
            wl = wd_ref[l]                     # (2R, 2R): rows [0:R]=W0, [R:]=W1
            if d < T:
                h_shift = jnp.concatenate(
                    [zeros_shift[:d], h[:T - d, :]], axis=0)        # (T, R)
                lhs = jnp.concatenate([h_shift, h], axis=1)          # (T, 2R)
                y = jnp.dot(lhs.astype(mxu_dtype), wl,
                            preferred_element_type=f32) + bd_ref[l]
            else:
                # first tap only sees zero padding -> drop that matmul entirely
                y = jnp.dot(h.astype(mxu_dtype), wl[n_res:, :],
                            preferred_element_type=f32) + bd_ref[l]

            x_f = jnp.tanh(y[:, :n_res])
            x_g = jax.nn.sigmoid(y[:, n_res:])
            z = x_f * x_g                                            # (T, R) f32

            # skip path only needs the decode tail; matmul is deferred & fused
            z_tails.append(z[tail_start:, :])                        # (tail, R)

            # residual 1x1 conv + add (result of the last layer is never used)
            if l < L - 1:
                h = h + jnp.dot(z.astype(mxu_dtype), wr_ref[l],
                                preferred_element_type=f32) + br_ref[l]

        # single fused skip matmul: (tail, L*R) @ (L*R, S)  (+ summed biases)
        zcat = jnp.concatenate(z_tails, axis=1).astype(mxu_dtype)
        skip = jnp.dot(zcat, ws_ref[...],
                       preferred_element_type=f32) + bs_ref[...]

        # head, computed only on the decode tail
        o = jnp.maximum(skip, 0.0)
        o = jnp.dot(o.astype(mxu_dtype), wout_ref[...],
                    preferred_element_type=f32)
        o = jnp.maximum(o, 0.0)
        # wend is zero-padded to 128 output lanes -> lane-dense (unmasked) store
        o = jnp.dot(o.astype(mxu_dtype), wend_ref[...],
                    preferred_element_type=f32)                      # (tail, 128)

        out_ref[bb] = o.astype(out_ref.dtype)


# ---------------------------------------------------------------------------
# Wrapper: PyTorch NCW in / NCW out.
# ---------------------------------------------------------------------------
def wavenet_forward(x_ncw, params, dilations, decode_len, *,
                    batch_block=None, mxu_dtype=jnp.bfloat16):
    B, Cin, T = x_ncw.shape
    L, _, n_res, _ = params["wd"].shape
    n_skip = params["ws"].shape[2]
    n_out = params["wend"].shape[1]
    n_out_pad = _round_up(n_out, 128)          # lane-dense output store

    # pack `batch_block` batch elements per grid step; keep >= 2 grid steps so
    # the "parallel" grid dim can still shard across v7x's two TensorCores.
    if batch_block is None:
        batch_block = max((d for d in range(1, B + 1)
                           if B % d == 0 and B // d >= 2), default=1)
    assert B % batch_block == 0
    grid = (B // batch_block,)

    x_btc = jnp.transpose(x_ncw, (0, 2, 1))    # (B, T, Cin)

    # ---- weight prep (cheap, wrapper-side XLA) ------------------------------
    # fused dilated-conv weight: (L, 2, R, 2R) -> (L, 2R, 2R); the kernel's
    # operand is concat([h_shifted, h], lanes), so rows [0:R] are the t-d tap.
    wd_fused = params["wd"].reshape(L, 2 * n_res, 2 * n_res).astype(mxu_dtype)
    # packed skip weight: one (L*R, S) matmul over the concatenated z tails
    ws_packed = params["ws"].reshape(L * n_res, n_skip).astype(mxu_dtype)
    bs_sum = jnp.sum(params["bs"], axis=0)                       # (1, S) f32
    # zero-pad conv_end output channels to a full 128-lane store
    wend_pad = jnp.pad(params["wend"],
                       ((0, 0), (0, n_out_pad - n_out))).astype(mxu_dtype)

    weight_args = (
        params["wstart"].astype(mxu_dtype),    # (Cin, R)
        wd_fused,                              # (L, 2R, 2R)
        params["bd"],                          # (L, 1, 2R)   f32
        params["wr"].astype(mxu_dtype),        # (L, R, R)
        params["br"],                          # (L, 1, R)    f32
        ws_packed,                             # (L*R, S)
        bs_sum,                                # (1, S)       f32
        params["wout"].astype(mxu_dtype),      # (S, n_out)
        wend_pad,                              # (n_out, n_out_pad)
    )

    def full_spec(arr):
        nd = arr.ndim
        return pl.BlockSpec(arr.shape, lambda b, _nd=nd: (0,) * _nd)

    kernel = functools.partial(
        _wavenet_kernel,
        dilations=tuple(int(d) for d in dilations),
        n_res=n_res, decode_len=decode_len, bblk=batch_block,
        mxu_dtype=mxu_dtype)

    out_padded = pl.pallas_call(
        kernel,
        out_shape=jax.ShapeDtypeStruct((B, decode_len, n_out_pad), x_ncw.dtype),
        grid=grid,
        in_specs=[pl.BlockSpec((batch_block, T, Cin), lambda b: (b, 0, 0))]
                 + [full_spec(w) for w in weight_args],
        out_specs=pl.BlockSpec((batch_block, decode_len, n_out_pad),
                               lambda b: (b, 0, 0)),
        compiler_params=pltpu.CompilerParams(
            dimension_semantics=("parallel",),
            vmem_limit_bytes=32 * 1024 * 1024),
    )(x_btc, *weight_args)

    out = out_padded[:, :, :n_out]                              # drop lane pad
    return jnp.transpose(out, (0, 2, 1))                        # (B, O, decode)


# ---------------------------------------------------------------------------
# Deterministic parameter init (synthetic; mirrors the PyTorch module shapes).
# ---------------------------------------------------------------------------
def init_params(key, n_in, n_res, n_skip, n_out, nr_layers, stack_time):
    dilations = [2 ** i for i in range(nr_layers)] * stack_time
    L = len(dilations)
    keys = jax.random.split(key, 9)

    def u(k, shape, scale):
        return jax.random.uniform(k, shape, jnp.float32, -scale, scale)

    params = dict(
        wstart=u(keys[0], (n_in, n_res), 0.5),                 # conv_start (no bias)
        wd=u(keys[1], (L, 2, n_res, 2 * n_res), 0.3),          # dilated convs (k=2)
        bd=u(keys[2], (L, 1, 2 * n_res), 0.1),
        wr=u(keys[3], (L, n_res, n_res), 0.3),                 # res 1x1 convs
        br=u(keys[4], (L, 1, n_res), 0.1),
        ws=u(keys[5], (L, n_res, n_skip), 0.3),                # skip 1x1 convs
        bs=u(keys[6], (L, 1, n_skip), 0.1),
        wout=u(keys[7], (n_skip, n_out), 0.3),                 # conv_out (no bias)
        wend=u(keys[8], (n_out, n_out), 0.3),                  # conv_end (no bias)
    )
    return params, dilations


# ---------------------------------------------------------------------------
# Pure-JAX reference (same math, f32, batched) for a correctness check.
# ---------------------------------------------------------------------------
def wavenet_reference(x_ncw, params, dilations, decode_len):
    x = jnp.transpose(x_ncw, (0, 2, 1)).astype(jnp.float32)    # (B, T, Cin)
    B, T, _ = x.shape
    n_res = params["wd"].shape[2]

    h = jnp.einsum("btc,cr->btr", x, params["wstart"])
    skip = None
    for l, d in enumerate(dilations):
        if d < T:
            h_shift = jnp.concatenate(
                [jnp.zeros((B, d, n_res), jnp.float32), h[:, :T - d, :]], axis=1)
        else:
            h_shift = jnp.zeros_like(h)
        y = (jnp.einsum("btr,rk->btk", h_shift, params["wd"][l, 0])
             + jnp.einsum("btr,rk->btk", h, params["wd"][l, 1])
             + params["bd"][l][None])
        z = jnp.tanh(y[..., :n_res]) * jax.nn.sigmoid(y[..., n_res:])
        h = h + jnp.einsum("btr,rk->btk", z, params["wr"][l]) + params["br"][l][None]
        s = jnp.einsum("btr,rk->btk", z, params["ws"][l]) + params["bs"][l][None]
        skip = s if skip is None else skip + s

    o = jnp.maximum(skip, 0.0)
    o = jnp.einsum("bts,so->bto", o, params["wout"])
    o = jnp.maximum(o, 0.0)
    o = jnp.einsum("bto,oe->bte", o, params["wend"])
    o = o[:, T - decode_len:, :]
    return jnp.transpose(o, (0, 2, 1))


def _bf16_stored_weights(params):
    """Round weights (not biases) to bf16, matching what the kernel feeds the MXU."""
    out = {}
    for k, v in params.items():
        if k.startswith("w"):
            out[k] = v.astype(jnp.bfloat16).astype(jnp.float32)
        else:
            out[k] = v
    return out


if __name__ == "__main__":
    # Small, module-consistent shapes.
    batch = 2
    n_in_channels = 4
    n_residual_channels = 8
    n_skip_channels = 8
    n_out_channels = 4
    nr_layers = 3
    stack_time = 2
    decode_len = 8
    encode_len = 16
    T = encode_len + decode_len - 1                            # 23

    key = jax.random.PRNGKey(0)
    k_params, k_x = jax.random.split(key)
    params, dilations = init_params(
        k_params, n_in_channels, n_residual_channels, n_skip_channels,
        n_out_channels, nr_layers, stack_time)

    forward_input = jax.random.normal(
        k_x, (batch, n_in_channels, T), dtype=jnp.float32)     # NCW like PyTorch

    out = wavenet_forward(forward_input, params, dilations, decode_len)
    out = jax.block_until_ready(out)

    # Reference with the same bf16-stored weights (kernel uses bf16 MXU operands
    # with f32 accumulation); remaining delta is activation rounding only.
    ref = wavenet_reference(forward_input, _bf16_stored_weights(params),
                            dilations, decode_len)

    assert out.shape == (batch, n_out_channels, decode_len), out.shape
    assert jnp.allclose(out, ref, atol=3e-2, rtol=3e-2), (
        float(jnp.max(jnp.abs(out - ref))))

    print("KERNEL_OK")
</pallas_src>

<mosaic_0001>
module attributes {stable_mosaic.version = 11 : i64} {
  func.func @_wavenet_kernel(%arg0: i32, %arg1: memref<1x23x4xf32, #tpu.memory_space<vmem>>, %arg2: memref<4x8xbf16, #tpu.memory_space<vmem>>, %arg3: memref<6x16x16xbf16, #tpu.memory_space<vmem>>, %arg4: memref<6x1x16xf32, #tpu.memory_space<vmem>>, %arg5: memref<6x8x8xbf16, #tpu.memory_space<vmem>>, %arg6: memref<6x1x8xf32, #tpu.memory_space<vmem>>, %arg7: memref<48x8xbf16, #tpu.memory_space<vmem>>, %arg8: memref<1x8xf32, #tpu.memory_space<vmem>>, %arg9: memref<8x4xbf16, #tpu.memory_space<vmem>>, %arg10: memref<4x128xbf16, #tpu.memory_space<vmem>>, %arg11: memref<1x8x128xf32, #tpu.memory_space<vmem>>) attributes {dimension_semantics = [#tpu.dimension_semantics<parallel>], iteration_bounds = array<i64: 2>, scalar_prefetch = 0 : i64, scratch_operands = 0 : i64, tpu.core_type = #tpu.core_type<tc>, window_params = [{transform_indices = @transform_0, window_bounds = array<i64: 1, 23, 4>}, {pipeline_mode = #tpu.pipeline_mode<synchronous>, transform_indices = @transform_1, window_bounds = array<i64: 4, 8>}, {pipeline_mode = #tpu.pipeline_mode<synchronous>, transform_indices = @transform_2, window_bounds = array<i64: 6, 16, 16>}, {pipeline_mode = #tpu.pipeline_mode<synchronous>, transform_indices = @transform_3, window_bounds = array<i64: 6, 1, 16>}, {pipeline_mode = #tpu.pipeline_mode<synchronous>, transform_indices = @transform_4, window_bounds = array<i64: 6, 8, 8>}, {pipeline_mode = #tpu.pipeline_mode<synchronous>, transform_indices = @transform_5, window_bounds = array<i64: 6, 1, 8>}, {pipeline_mode = #tpu.pipeline_mode<synchronous>, transform_indices = @transform_6, window_bounds = array<i64: 48, 8>}, {pipeline_mode = #tpu.pipeline_mode<synchronous>, transform_indices = @transform_7, window_bounds = array<i64: 1, 8>}, {pipeline_mode = #tpu.pipeline_mode<synchronous>, transform_indices = @transform_8, window_bounds = array<i64: 8, 4>}, {pipeline_mode = #tpu.pipeline_mode<synchronous>, transform_indices = @transform_9, window_bounds = array<i64: 4, 128>}, {transform_indices = @transform_10, window_bounds = array<i64: 1, 8, 128>}]} {
    %cst = arith.constant 0.000000e+00 : f32
    %0 = vector.broadcast %cst : f32 to vector<4x8xf32>
    %c0 = arith.constant 0 : index
    %c0_0 = arith.constant 0 : index
    %c0_1 = arith.constant 0 : index
    %1 = vector.load %arg1[%c0, %c0_0, %c0_1] : memref<1x23x4xf32, #tpu.memory_space<vmem>>, vector<1x23x4xf32>
    %2 = vector.shape_cast %1 : vector<1x23x4xf32> to vector<23x4xf32>
    %3 = arith.truncf %2 : vector<23x4xf32> to vector<23x4xbf16>
    %c0_2 = arith.constant 0 : index
    %c0_3 = arith.constant 0 : index
    %4 = vector.load %arg2[%c0_2, %c0_3] : memref<4x8xbf16, #tpu.memory_space<vmem>>, vector<4x8xbf16>
    %cst_4 = arith.constant dense<0.000000e+00> : vector<23x8xf32>
    %5 = tpu.matmul %3, %4, %cst_4 {dimension_numbers = #tpu.dot_dimension_numbers<[1], [0], [0], [1], [0, 0, 1, 1], [], []>} : vector<23x4xbf16>, vector<4x8xbf16>, vector<23x8xf32> -> vector<23x8xf32>
    %c0_5 = arith.constant 0 : index
    %c0_6 = arith.constant 0 : index
    %c0_7 = arith.constant 0 : index
    %6 = vector.load %arg3[%c0_5, %c0_6, %c0_7] : memref<6x16x16xbf16, #tpu.memory_space<vmem>>, vector<1x16x16xbf16>
    %7 = vector.shape_cast %6 : vector<1x16x16xbf16> to vector<16x16xbf16>
    %8 = vector.extract_strided_slice %0 {offsets = [0, 0], sizes = [1, 8], strides = [1, 1]} : vector<4x8xf32> to vector<1x8xf32>
    %9 = vector.extract_strided_slice %5 {offsets = [0, 0], sizes = [22, 8], strides = [1, 1]} : vector<23x8xf32> to vector<22x8xf32>
    %10 = tpu.concatenate %8, %9 in 0 : vector<1x8xf32>, vector<22x8xf32> -> vector<23x8xf32>
    %11 = tpu.concatenate %10, %5 in 1 : vector<23x8xf32>, vector<23x8xf32> -> vector<23x16xf32>
    %12 = arith.truncf %11 : vector<23x16xf32> to vector<23x16xbf16>
    %cst_8 = arith.constant dense<0.000000e+00> : vector<23x16xf32>
    %13 = tpu.matmul %12, %7, %cst_8 {dimension_numbers = #tpu.dot_dimension_numbers<[1], [0], [0], [1], [0, 0, 1, 1], [], []>} : vector<23x16xbf16>, vector<16x16xbf16>, vector<23x16xf32> -> vector<23x16xf32>
    %c0_9 = arith.constant 0 : index
    %c0_10 = arith.constant 0 : index
    %c0_11 = arith.constant 0 : index
    %14 = vector.load %arg4[%c0_9, %c0_10, %c0_11] : memref<6x1x16xf32, #tpu.memory_space<vmem>>, vector<1x1x16xf32>
    %15 = vector.shape_cast %14 : vector<1x1x16xf32> to vector<1x16xf32>
    %16 = vector.broadcast %15 : vector<1x16xf32> to vector<23x16xf32>
    %17 = arith.addf %13, %16 : vector<23x16xf32>
    %18 = vector.extract_strided_slice %17 {offsets = [0, 0], sizes = [23, 8], strides = [1, 1]} : vector<23x16xf32> to vector<23x8xf32>
    %19 = math.tanh %18 : vector<23x8xf32>
    %20 = vector.extract_strided_slice %17 {offsets = [0, 8], sizes = [23, 8], strides = [1, 1]} : vector<23x16xf32> to vector<23x8xf32>
    %21 = arith.negf %20 : vector<23x8xf32>
    %22 = math.exp %21 : vector<23x8xf32>
    %cst_12 = arith.constant 1.000000e+00 : f32
    %23 = vector.broadcast %cst_12 : f32 to vector<23x8xf32>
    %24 = arith.addf %23, %22 : vector<23x8xf32>
    %25 = arith.divf %23, %24 : vector<23x8xf32>
    %26 = arith.mulf %19, %25 : vector<23x8xf32>
    %27 = vector.extract_strided_slice %26 {offsets = [15, 0], sizes = [8, 8], strides = [1, 1]} : vector<23x8xf32> to vector<8x8xf32>
    %28 = arith.truncf %26 : vector<23x8xf32> to vector<23x8xbf16>
    %c0_13 = arith.constant 0 : index
    %c0_14 = arith.constant 0 : index
    %c0_15 = arith.constant 0 : index
    %29 = vector.load %arg5[%c0_13, %c0_14, %c0_15] : memref<6x8x8xbf16, #tpu.memory_space<vmem>>, vector<1x8x8xbf16>
    %30 = vector.shape_cast %29 : vector<1x8x8xbf16> to vector<8x8xbf16>
    %cst_16 = arith.constant dense<0.000000e+00> : vector<23x8xf32>
    %31 = tpu.matmul %28, %30, %cst_16 {dimension_numbers = #tpu.dot_dimension_numbers<[1], [0], [0], [1], [0, 0, 1, 1], [], []>} : vector<23x8xbf16>, vector<8x8xbf16>, vector<23x8xf32> -> vector<23x8xf32>
    %32 = arith.addf %5, %31 : vector<23x8xf32>
    %c0_17 = arith.constant 0 : index
    %c0_18 = arith.constant 0 : index
    %c0_19 = arith.constant 0 : index
    %33 = vector.load %arg6[%c0_17, %c0_18, %c0_19] : memref<6x1x8xf32, #tpu.memory_space<vmem>>, vector<1x1x8xf32>
    %34 = vector.shape_cast %33 : vector<1x1x8xf32> to vector<1x8xf32>
    %35 = vector.broadcast %34 : vector<1x8xf32> to vector<23x8xf32>
    %36 = arith.addf %32, %35 : vector<23x8xf32>
    %c1 = arith.constant 1 : index
    %c0_20 = arith.constant 0 : index
    %c0_21 = arith.constant 0 : index
    %37 = vector.load %arg3[%c1, %c0_20, %c0_21] : memref<6x16x16xbf16, #tpu.memory_space<vmem>>, vector<1x16x16xbf16>
    %38 = vector.shape_cast %37 : vector<1x16x16xbf16> to vector<16x16xbf16>
    %39 = vector.extract_strided_slice %0 {offsets = [0, 0], sizes = [2, 8], strides = [1, 1]} : vector<4x8xf32> to vector<2x8xf32>
    %40 = vector.extract_strided_slice %36 {offsets = [0, 0], sizes = [21, 8], strides = [1, 1]} : vector<23x8xf32> to vector<21x8xf32>
    %41 = tpu.concatenate %39, %40 in 0 : vector<2x8xf32>, vector<21x8xf32> -> vector<23x8xf32>
    %42 = tpu.concatenate %41, %36 in 1 : vector<23x8xf32>, vector<23x8xf32> -> vector<23x16xf32>
    %43 = arith.truncf %42 : vector<23x16xf32> to vector<23x16xbf16>
    %cst_22 = arith.constant dense<0.000000e+00> : vector<23x16xf32>
    %44 = tpu.matmul %43, %38, %cst_22 {dimension_numbers = #tpu.dot_dimension_numbers<[1], [0], [0], [1], [0, 0, 1, 1], [], []>} : vector<23x16xbf16>, vector<16x16xbf16>, vector<23x16xf32> -> vector<23x16xf32>
    %c1_23 = arith.constant 1 : index
    %c0_24 = arith.constant 0 : index
    %c0_25 = arith.constant 0 : index
    %45 = vector.load %arg4[%c1_23, %c0_24, %c0_25] : memref<6x1x16xf32, #tpu.memory_space<vmem>>, vector<1x1x16xf32>
    %46 = vector.shape_cast %45 : vector<1x1x16xf32> to vector<1x16xf32>
    %47 = vector.broadcast %46 : vector<1x16xf32> to vector<23x16xf32>
    %48 = arith.addf %44, %47 : vector<23x16xf32>
    %49 = vector.extract_strided_slice %48 {offsets = [0, 0], sizes = [23, 8], strides = [1, 1]} : vector<23x16xf32> to vector<23x8xf32>
    %50 = math.tanh %49 : vector<23x8xf32>
    %51 = vector.extract_strided_slice %48 {offsets = [0, 8], sizes = [23, 8], strides = [1, 1]} : vector<23x16xf32> to vector<23x8xf32>
    %52 = arith.negf %51 : vector<23x8xf32>
    %53 = math.exp %52 : vector<23x8xf32>
    %cst_26 = arith.constant 1.000000e+00 : f32
    %54 = vector.broadcast %cst_26 : f32 to vector<23x8xf32>
    %55 = arith.addf %54, %53 : vector<23x8xf32>
    %56 = arith.divf %54, %55 : vector<23x8xf32>
    %57 = arith.mulf %50, %56 : vector<23x8xf32>
    %58 = vector.extract_strided_slice %57 {offsets = [15, 0], sizes = [8, 8], strides = [1, 1]} : vector<23x8xf32> to vector<8x8xf32>
    %59 = arith.truncf %57 : vector<23x8xf32> to vector<23x8xbf16>
    %c1_27 = arith.constant 1 : index
    %c0_28 = arith.constant 0 : index
    %c0_29 = arith.constant 0 : index
    %60 = vector.load %arg5[%c1_27, %c0_28, %c0_29] : memref<6x8x8xbf16, #tpu.memory_space<vmem>>, vector<1x8x8xbf16>
    %61 = vector.shape_cast %60 : vector<1x8x8xbf16> to vector<8x8xbf16>
    %cst_30 = arith.constant dense<0.000000e+00> : vector<23x8xf32>
    %62 = tpu.matmul %59, %61, %cst_30 {dimension_numbers = #tpu.dot_dimension_numbers<[1], [0], [0], [1], [0, 0, 1, 1], [], []>} : vector<23x8xbf16>, vector<8x8xbf16>, vector<23x8xf32> -> vector<23x8xf32>
    %63 = arith.addf %36, %62 : vector<23x8xf32>
    %c1_31 = arith.constant 1 : index
    %c0_32 = arith.constant 0 : index
    %c0_33 = arith.constant 0 : index
    %64 = vector.load %arg6[%c1_31, %c0_32, %c0_33] : memref<6x1x8xf32, #tpu.memory_space<vmem>>, vector<1x1x8xf32>
    %65 = vector.shape_cast %64 : vector<1x1x8xf32> to vector<1x8xf32>
    %66 = vector.broadcast %65 : vector<1x8xf32> to vector<23x8xf32>
    %67 = arith.addf %63, %66 : vector<23x8xf32>
    %c2 = arith.constant 2 : index
    %c0_34 = arith.constant 0 : index
    %c0_35 = arith.constant 0 : index
    %68 = vector.load %arg3[%c2, %c0_34, %c0_35] : memref<6x16x16xbf16, #tpu.memory_space<vmem>>, vector<1x16x16xbf16>
    %69 = vector.shape_cast %68 : vector<1x16x16xbf16> to vector<16x16xbf16>
    %70 = vector.extract_strided_slice %67 {offsets = [0, 0], sizes = [19, 8], strides = [1, 1]} : vector<23x8xf32> to vector<19x8xf32>
    %71 = tpu.concatenate %0, %70 in 0 : vector<4x8xf32>, vector<19x8xf32> -> vector<23x8xf32>
    %72 = tpu.concatenate %71, %67 in 1 : vector<23x8xf32>, vector<23x8xf32> -> vector<23x16xf32>
    %73 = arith.truncf %72 : vector<23x16xf32> to vector<23x16xbf16>
    %cst_36 = arith.constant dense<0.000000e+00> : vector<23x16xf32>
    %74 = tpu.matmul %73, %69, %cst_36 {dimension_numbers = #tpu.dot_dimension_numbers<[1], [0], [0], [1], [0, 0, 1, 1], [], []>} : vector<23x16xbf16>, vector<16x16xbf16>, vector<23x16xf32> -> vector<23x16xf32>
    %c2_37 = arith.constant 2 : index
    %c0_38 = arith.constant 0 : index
    %c0_39 = arith.constant 0 : index
    %75 = vector.load %arg4[%c2_37, %c0_38, %c0_39] : memref<6x1x16xf32, #tpu.memory_space<vmem>>, vector<1x1x16xf32>
    %76 = vector.shape_cast %75 : vector<1x1x16xf32> to vector<1x16xf32>
    %77 = vector.broadcast %76 : vector<1x16xf32> to vector<23x16xf32>
    %78 = arith.addf %74, %77 : vector<23x16xf32>
    %79 = vector.extract_strided_slice %78 {offsets = [0, 0], sizes = [23, 8], strides = [1, 1]} : vector<23x16xf32> to vector<23x8xf32>
    %80 = math.tanh %79 : vector<23x8xf32>
    %81 = vector.extract_strided_slice %78 {offsets = [0, 8], sizes = [23, 8], strides = [1, 1]} : vector<23x16xf32> to vector<23x8xf32>
    %82 = arith.negf %81 : vector<23x8xf32>
    %83 = math.exp %82 : vector<23x8xf32>
    %cst_40 = arith.constant 1.000000e+00 : f32
    %84 = vector.broadcast %cst_40 : f32 to vector<23x8xf32>
    %85 = arith.addf %84, %83 : vector<23x8xf32>
    %86 = arith.divf %84, %85 : vector<23x8xf32>
    %87 = arith.mulf %80, %86 : vector<23x8xf32>
    %88 = vector.extract_strided_slice %87 {offsets = [15, 0], sizes = [8, 8], strides = [1, 1]} : vector<23x8xf32> to vector<8x8xf32>
    %89 = arith.truncf %87 : vector<23x8xf32> to vector<23x8xbf16>
    %c2_41 = arith.constant 2 : index
    %c0_42 = arith.constant 0 : index
    %c0_43 = arith.constant 0 : index
    %90 = vector.load %arg5[%c2_41, %c0_42, %c0_43] : memref<6x8x8xbf16, #tpu.memory_space<vmem>>, vector<1x8x8xbf16>
    %91 = vector.shape_cast %90 : vector<1x8x8xbf16> to vector<8x8xbf16>
    %cst_44 = arith.constant dense<0.000000e+00> : vector<23x8xf32>
    %92 = tpu.matmul %89, %91, %cst_44 {dimension_numbers = #tpu.dot_dimension_numbers<[1], [0], [0], [1], [0, 0, 1, 1], [], []>} : vector<23x8xbf16>, vector<8x8xbf16>, vector<23x8xf32> -> vector<23x8xf32>
    %93 = arith.addf %67, %92 : vector<23x8xf32>
    %c2_45 = arith.constant 2 : index
    %c0_46 = arith.constant 0 : index
    %c0_47 = arith.constant 0 : index
    %94 = vector.load %arg6[%c2_45, %c0_46, %c0_47] : memref<6x1x8xf32, #tpu.memory_space<vmem>>, vector<1x1x8xf32>
    %95 = vector.shape_cast %94 : vector<1x1x8xf32> to vector<1x8xf32>
    %96 = vector.broadcast %95 : vector<1x8xf32> to vector<23x8xf32>
    %97 = arith.addf %93, %96 : vector<23x8xf32>
    %c3 = arith.constant 3 : index
    %c0_48 = arith.constant 0 : index
    %c0_49 = arith.constant 0 : index
    %98 = vector.load %arg3[%c3, %c0_48, %c0_49] : memref<6x16x16xbf16, #tpu.memory_space<vmem>>, vector<1x16x16xbf16>
    %99 = vector.shape_cast %98 : vector<1x16x16xbf16> to vector<16x16xbf16>
    %100 = vector.extract_strided_slice %0 {offsets = [0, 0], sizes = [1, 8], strides = [1, 1]} : vector<4x8xf32> to vector<1x8xf32>
    %101 = vector.extract_strided_slice %97 {offsets = [0, 0], sizes = [22, 8], strides = [1, 1]} : vector<23x8xf32> to vector<22x8xf32>
    %102 = tpu.concatenate %100, %101 in 0 : vector<1x8xf32>, vector<22x8xf32> -> vector<23x8xf32>
    %103 = tpu.concatenate %102, %97 in 1 : vector<23x8xf32>, vector<23x8xf32> -> vector<23x16xf32>
    %104 = arith.truncf %103 : vector<23x16xf32> to vector<23x16xbf16>
    %cst_50 = arith.constant dense<0.000000e+00> : vector<23x16xf32>
    %105 = tpu.matmul %104, %99, %cst_50 {dimension_numbers = #tpu.dot_dimension_numbers<[1], [0], [0], [1], [0, 0, 1, 1], [], []>} : vector<23x16xbf16>, vector<16x16xbf16>, vector<23x16xf32> -> vector<23x16xf32>
    %c3_51 = arith.constant 3 : index
    %c0_52 = arith.constant 0 : index
    %c0_53 = arith.constant 0 : index
    %106 = vector.load %arg4[%c3_51, %c0_52, %c0_53] : memref<6x1x16xf32, #tpu.memory_space<vmem>>, vector<1x1x16xf32>
    %107 = vector.shape_cast %106 : vector<1x1x16xf32> to vector<1x16xf32>
    %108 = vector.broadcast %107 : vector<1x16xf32> to vector<23x16xf32>
    %109 = arith.addf %105, %108 : vector<23x16xf32>
    %110 = vector.extract_strided_slice %109 {offsets = [0, 0], sizes = [23, 8], strides = [1, 1]} : vector<23x16xf32> to vector<23x8xf32>
    %111 = math.tanh %110 : vector<23x8xf32>
    %112 = vector.extract_strided_slice %109 {offsets = [0, 8], sizes = [23, 8], strides = [1, 1]} : vector<23x16xf32> to vector<23x8xf32>
    %113 = arith.negf %112 : vector<23x8xf32>
    %114 = math.exp %113 : vector<23x8xf32>
    %cst_54 = arith.constant 1.000000e+00 : f32
    %115 = vector.broadcast %cst_54 : f32 to vector<23x8xf32>
    %116 = arith.addf %115, %114 : vector<23x8xf32>
    %117 = arith.divf %115, %116 : vector<23x8xf32>
    %118 = arith.mulf %111, %117 : vector<23x8xf32>
    %119 = vector.extract_strided_slice %118 {offsets = [15, 0], sizes = [8, 8], strides = [1, 1]} : vector<23x8xf32> to vector<8x8xf32>
    %120 = arith.truncf %118 : vector<23x8xf32> to vector<23x8xbf16>
    %c3_55 = arith.constant 3 : index
    %c0_56 = arith.constant 0 : index
    %c0_57 = arith.constant 0 : index
    %121 = vector.load %arg5[%c3_55, %c0_56, %c0_57] : memref<6x8x8xbf16, #tpu.memory_space<vmem>>, vector<1x8x8xbf16>
    %122 = vector.shape_cast %121 : vector<1x8x8xbf16> to vector<8x8xbf16>
    %cst_58 = arith.constant dense<0.000000e+00> : vector<23x8xf32>
    %123 = tpu.matmul %120, %122, %cst_58 {dimension_numbers = #tpu.dot_dimension_numbers<[1], [0], [0], [1], [0, 0, 1, 1], [], []>} : vector<23x8xbf16>, vector<8x8xbf16>, vector<23x8xf32> -> vector<23x8xf32>
    %124 = arith.addf %97, %123 : vector<23x8xf32>
    %c3_59 = arith.constant 3 : index
    %c0_60 = arith.constant 0 : index
    %c0_61 = arith.constant 0 : index
    %125 = vector.load %arg6[%c3_59, %c0_60, %c0_61] : memref<6x1x8xf32, #tpu.memory_space<vmem>>, vector<1x1x8xf32>
    %126 = vector.shape_cast %125 : vector<1x1x8xf32> to vector<1x8xf32>
    %127 = vector.broadcast %126 : vector<1x8xf32> to vector<23x8xf32>
    %128 = arith.addf %124, %127 : vector<23x8xf32>
    %c4 = arith.constant 4 : index
    %c0_62 = arith.constant 0 : index
    %c0_63 = arith.constant 0 : index
    %129 = vector.load %arg3[%c4, %c0_62, %c0_63] : memref<6x16x16xbf16, #tpu.memory_space<vmem>>, vector<1x16x16xbf16>
    %130 = vector.shape_cast %129 : vector<1x16x16xbf16> to vector<16x16xbf16>
    %131 = vector.extract_strided_slice %0 {offsets = [0, 0], sizes = [2, 8], strides = [1, 1]} : vector<4x8xf32> to vector<2x8xf32>
    %132 = vector.extract_strided_slice %128 {offsets = [0, 0], sizes = [21, 8], strides = [1, 1]} : vector<23x8xf32> to vector<21x8xf32>
    %133 = tpu.concatenate %131, %132 in 0 : vector<2x8xf32>, vector<21x8xf32> -> vector<23x8xf32>
    %134 = tpu.concatenate %133, %128 in 1 : vector<23x8xf32>, vector<23x8xf32> -> vector<23x16xf32>
    %135 = arith.truncf %134 : vector<23x16xf32> to vector<23x16xbf16>
    %cst_64 = arith.constant dense<0.000000e+00> : vector<23x16xf32>
    %136 = tpu.matmul %135, %130, %cst_64 {dimension_numbers = #tpu.dot_dimension_numbers<[1], [0], [0], [1], [0, 0, 1, 1], [], []>} : vector<23x16xbf16>, vector<16x16xbf16>, vector<23x16xf32> -> vector<23x16xf32>
    %c4_65 = arith.constant 4 : index
    %c0_66 = arith.constant 0 : index
    %c0_67 = arith.constant 0 : index
    %137 = vector.load %arg4[%c4_65, %c0_66, %c0_67] : memref<6x1x16xf32, #tpu.memory_space<vmem>>, vector<1x1x16xf32>
    %138 = vector.shape_cast %137 : vector<1x1x16xf32> to vector<1x16xf32>
    %139 = vector.broadcast %138 : vector<1x16xf32> to vector<23x16xf32>
    %140 = arith.addf %136, %139 : vector<23x16xf32>
    %141 = vector.extract_strided_slice %140 {offsets = [0, 0], sizes = [23, 8], strides = [1, 1]} : vector<23x16xf32> to vector<23x8xf32>
    %142 = math.tanh %141 : vector<23x8xf32>
    %143 = vector.extract_strided_slice %140 {offsets = [0, 8], sizes = [23, 8], strides = [1, 1]} : vector<23x16xf32> to vector<23x8xf32>
    %144 = arith.negf %143 : vector<23x8xf32>
    %145 = math.exp %144 : vector<23x8xf32>
    %cst_68 = arith.constant 1.000000e+00 : f32
    %146 = vector.broadcast %cst_68 : f32 to vector<23x8xf32>
    %147 = arith.addf %146, %145 : vector<23x8xf32>
    %148 = arith.divf %146, %147 : vector<23x8xf32>
    %149 = arith.mulf %142, %148 : vector<23x8xf32>
    %150 = vector.extract_strided_slice %149 {offsets = [15, 0], sizes = [8, 8], strides = [1, 1]} : vector<23x8xf32> to vector<8x8xf32>
    %151 = arith.truncf %149 : vector<23x8xf32> to vector<23x8xbf16>
    %c4_69 = arith.constant 4 : index
    %c0_70 = arith.constant 0 : index
    %c0_71 = arith.constant 0 : index
    %152 = vector.load %arg5[%c4_69, %c0_70, %c0_71] : memref<6x8x8xbf16, #tpu.memory_space<vmem>>, vector<1x8x8xbf16>
    %153 = vector.shape_cast %152 : vector<1x8x8xbf16> to vector<8x8xbf16>
    %cst_72 = arith.constant dense<0.000000e+00> : vector<23x8xf32>
    %154 = tpu.matmul %151, %153, %cst_72 {dimension_numbers = #tpu.dot_dimension_numbers<[1], [0], [0], [1], [0, 0, 1, 1], [], []>} : vector<23x8xbf16>, vector<8x8xbf16>, vector<23x8xf32> -> vector<23x8xf32>
    %155 = arith.addf %128, %154 : vector<23x8xf32>
    %c4_73 = arith.constant 4 : index
    %c0_74 = arith.constant 0 : index
    %c0_75 = arith.constant 0 : index
    %156 = vector.load %arg6[%c4_73, %c0_74, %c0_75] : memref<6x1x8xf32, #tpu.memory_space<vmem>>, vector<1x1x8xf32>
    %157 = vector.shape_cast %156 : vector<1x1x8xf32> to vector<1x8xf32>
    %158 = vector.broadcast %157 : vector<1x8xf32> to vector<23x8xf32>
    %159 = arith.addf %155, %158 : vector<23x8xf32>
    %c5 = arith.constant 5 : index
    %c0_76 = arith.constant 0 : index
    %c0_77 = arith.constant 0 : index
    %160 = vector.load %arg3[%c5, %c0_76, %c0_77] : memref<6x16x16xbf16, #tpu.memory_space<vmem>>, vector<1x16x16xbf16>
    %161 = vector.shape_cast %160 : vector<1x16x16xbf16> to vector<16x16xbf16>
    %162 = vector.extract_strided_slice %159 {offsets = [0, 0], sizes = [19, 8], strides = [1, 1]} : vector<23x8xf32> to vector<19x8xf32>
    %163 = tpu.concatenate %0, %162 in 0 : vector<4x8xf32>, vector<19x8xf32> -> vector<23x8xf32>
    %164 = tpu.concatenate %163, %159 in 1 : vector<23x8xf32>, vector<23x8xf32> -> vector<23x16xf32>
    %165 = arith.truncf %164 : vector<23x16xf32> to vector<23x16xbf16>
    %cst_78 = arith.constant dense<0.000000e+00> : vector<23x16xf32>
    %166 = tpu.matmul %165, %161, %cst_78 {dimension_numbers = #tpu.dot_dimension_numbers<[1], [0], [0], [1], [0, 0, 1, 1], [], []>} : vector<23x16xbf16>, vector<16x16xbf16>, vector<23x16xf32> -> vector<23x16xf32>
    %c5_79 = arith.constant 5 : index
    %c0_80 = arith.constant 0 : index
    %c0_81 = arith.constant 0 : index
    %167 = vector.load %arg4[%c5_79, %c0_80, %c0_81] : memref<6x1x16xf32, #tpu.memory_space<vmem>>, vector<1x1x16xf32>
    %168 = vector.shape_cast %167 : vector<1x1x16xf32> to vector<1x16xf32>
    %169 = vector.broadcast %168 : vector<1x16xf32> to vector<23x16xf32>
    %170 = arith.addf %166, %169 : vector<23x16xf32>
    %171 = vector.extract_strided_slice %170 {offsets = [0, 0], sizes = [23, 8], strides = [1, 1]} : vector<23x16xf32> to vector<23x8xf32>
    %172 = math.tanh %171 : vector<23x8xf32>
    %173 = vector.extract_strided_slice %170 {offsets = [0, 8], sizes = [23, 8], strides = [1, 1]} : vector<23x16xf32> to vector<23x8xf32>
    %174 = arith.negf %173 : vector<23x8xf32>
    %175 = math.exp %174 : vector<23x8xf32>
    %cst_82 = arith.constant 1.000000e+00 : f32
    %176 = vector.broadcast %cst_82 : f32 to vector<23x8xf32>
    %177 = arith.addf %176, %175 : vector<23x8xf32>
    %178 = arith.divf %176, %177 : vector<23x8xf32>
    %179 = arith.mulf %172, %178 : vector<23x8xf32>
    %180 = vector.extract_strided_slice %179 {offsets = [15, 0], sizes = [8, 8], strides = [1, 1]} : vector<23x8xf32> to vector<8x8xf32>
    %181 = tpu.concatenate %27, %58, %88, %119, %150, %180 in 1 : vector<8x8xf32>, vector<8x8xf32>, vector<8x8xf32>, vector<8x8xf32>, vector<8x8xf32>, vector<8x8xf32> -> vector<8x48xf32>
    %182 = arith.truncf %181 : vector<8x48xf32> to vector<8x48xbf16>
    %c0_83 = arith.constant 0 : index
    %c0_84 = arith.constant 0 : index
    %183 = vector.load %arg7[%c0_83, %c0_84] : memref<48x8xbf16, #tpu.memory_space<vmem>>, vector<48x8xbf16>
    %cst_85 = arith.constant dense<0.000000e+00> : vector<8x8xf32>
    %184 = tpu.matmul %182, %183, %cst_85 {dimension_numbers = #tpu.dot_dimension_numbers<[1], [0], [0], [1], [0, 0, 1, 1], [], []>} : vector<8x48xbf16>, vector<48x8xbf16>, vector<8x8xf32> -> vector<8x8xf32>
    %c0_86 = arith.constant 0 : index
    %c0_87 = arith.constant 0 : index
    %185 = vector.load %arg8[%c0_86, %c0_87] : memref<1x8xf32, #tpu.memory_space<vmem>>, vector<1x8xf32>
    %186 = vector.broadcast %185 : vector<1x8xf32> to vector<8x8xf32>
    %187 = arith.addf %184, %186 : vector<8x8xf32>
    %cst_88 = arith.constant 0.000000e+00 : f32
    %188 = vector.broadcast %cst_88 : f32 to vector<8x8xf32>
    %189 = arith.maximumf %187, %188 : vector<8x8xf32>
    %190 = arith.truncf %189 : vector<8x8xf32> to vector<8x8xbf16>
    %c0_89 = arith.constant 0 : index
    %c0_90 = arith.constant 0 : index
    %191 = vector.load %arg9[%c0_89, %c0_90] : memref<8x4xbf16, #tpu.memory_space<vmem>>, vector<8x4xbf16>
    %cst_91 = arith.constant dense<0.000000e+00> : vector<8x4xf32>
    %192 = tpu.matmul %190, %191, %cst_91 {dimension_numbers = #tpu.dot_dimension_numbers<[1], [0], [0], [1], [0, 0, 1, 1], [], []>} : vector<8x8xbf16>, vector<8x4xbf16>, vector<8x4xf32> -> vector<8x4xf32>
    %cst_92 = arith.constant 0.000000e+00 : f32
    %193 = vector.broadcast %cst_92 : f32 to vector<8x4xf32>
    %194 = arith.maximumf %192, %193 : vector<8x4xf32>
    %195 = arith.truncf %194 : vector<8x4xf32> to vector<8x4xbf16>
    %c0_93 = arith.constant 0 : index
    %c0_94 = arith.constant 0 : index
    %196 = vector.load %arg10[%c0_93, %c0_94] : memref<4x128xbf16, #tpu.memory_space<vmem>>, vector<4x128xbf16>
    %cst_95 = arith.constant dense<0.000000e+00> : vector<8x128xf32>
    %197 = tpu.matmul %195, %196, %cst_95 {dimension_numbers = #tpu.dot_dimension_numbers<[1], [0], [0], [1], [0, 0, 1, 1], [], []>} : vector<8x4xbf16>, vector<4x128xbf16>, vector<8x128xf32> -> vector<8x128xf32>
    %c0_96 = arith.constant 0 : index
    %c0_97 = arith.constant 0 : index
    %c0_98 = arith.constant 0 : index
    %198 = vector.load %arg11[%c0_96, %c0_97, %c0_98] : memref<1x8x128xf32, #tpu.memory_space<vmem>>, vector<1x8x128xf32>
    %199 = vector.shape_cast %198 : vector<1x8x128xf32> to vector<8x128xf32>
    %200 = vector.shape_cast %197 : vector<8x128xf32> to vector<1x8x128xf32>
    tpu.vector_store %arg11[%c0_96, %c0_97, %c0_98], %200 {strides = array<i32>} : memref<1x8x128xf32, #tpu.memory_space<vmem>>, vector<1x8x128xf32>,
    return
  }
  func.func @transform_0(%arg0: i32) -> (i32, i32, i32) {
    %c0_i32 = arith.constant 0 : i32
    %c0_i32_0 = arith.constant 0 : i32
    %c0_i32_1 = arith.constant 0 : i32
    return %arg0, %c0_i32, %c0_i32_0 : i32, i32, i32
  }
  func.func @transform_1(%arg0: i32) -> (i32, i32) {
    %c0_i32 = arith.constant 0 : i32
    %c0_i32_0 = arith.constant 0 : i32
    %c0_i32_1 = arith.constant 0 : i32
    return %c0_i32, %c0_i32_0 : i32, i32
  }
  func.func @transform_2(%arg0: i32) -> (i32, i32, i32) {
    %c0_i32 = arith.constant 0 : i32
    %c0_i32_0 = arith.constant 0 : i32
    %c0_i32_1 = arith.constant 0 : i32
    %c0_i32_2 = arith.constant 0 : i32
    return %c0_i32, %c0_i32_0, %c0_i32_1 : i32, i32, i32
  }
  func.func @transform_3(%arg0: i32) -> (i32, i32, i32) {
    %c0_i32 = arith.constant 0 : i32
    %c0_i32_0 = arith.constant 0 : i32
    %c0_i32_1 = arith.constant 0 : i32
    %c0_i32_2 = arith.constant 0 : i32
    return %c0_i32, %c0_i32_0, %c0_i32_1 : i32, i32, i32
  }
  func.func @transform_4(%arg0: i32) -> (i32, i32, i32) {
    %c0_i32 = arith.constant 0 : i32
    %c0_i32_0 = arith.constant 0 : i32
    %c0_i32_1 = arith.constant 0 : i32
    %c0_i32_2 = arith.constant 0 : i32
    return %c0_i32, %c0_i32_0, %c0_i32_1 : i32, i32, i32
  }
  func.func @transform_5(%arg0: i32) -> (i32, i32, i32) {
    %c0_i32 = arith.constant 0 : i32
    %c0_i32_0 = arith.constant 0 : i32
    %c0_i32_1 = arith.constant 0 : i32
    %c0_i32_2 = arith.constant 0 : i32
    return %c0_i32, %c0_i32_0, %c0_i32_1 : i32, i32, i32
  }
  func.func @transform_6(%arg0: i32) -> (i32, i32) {
    %c0_i32 = arith.constant 0 : i32
    %c0_i32_0 = arith.constant 0 : i32
    %c0_i32_1 = arith.constant 0 : i32
    return %c0_i32, %c0_i32_0 : i32, i32
  }
  func.func @transform_7(%arg0: i32) -> (i32, i32) {
    %c0_i32 = arith.constant 0 : i32
    %c0_i32_0 = arith.constant 0 : i32
    %c0_i32_1 = arith.constant 0 : i32
    return %c0_i32, %c0_i32_0 : i32, i32
  }
  func.func @transform_8(%arg0: i32) -> (i32, i32) {
    %c0_i32 = arith.constant 0 : i32
    %c0_i32_0 = arith.constant 0 : i32
    %c0_i32_1 = arith.constant 0 : i32
    return %c0_i32, %c0_i32_0 : i32, i32
  }
  func.func @transform_9(%arg0: i32) -> (i32, i32) {
    %c0_i32 = arith.constant 0 : i32
    %c0_i32_0 = arith.constant 0 : i32
    %c0_i32_1 = arith.constant 0 : i32
    return %c0_i32, %c0_i32_0 : i32, i32
  }
  func.func @transform_10(%arg0: i32) -> (i32, i32, i32) {
    %c0_i32 = arith.constant 0 : i32
    %c0_i32_0 = arith.constant 0 : i32
    %c0_i32_1 = arith.constant 0 : i32
    return %arg0, %c0_i32, %c0_i32_0 : i32, i32, i32
  }
}

</mosaic_0001>

<llo_original>
// kernel: tpu_custom_call.1
$region0: #{tpu_custom_call.1}
  #allocation0 [shape = 'u32[]', space=smem, size = 0x4, offset = 0x4, fixed_abs, tag = 'smem constant byte address 0x4 - core index']
  #allocation1 [shape = 'u32[144,128]{1,0:T(1,128)}', space=vmem, size = 0x12000, scoped, tag = 'internal scratch']
  %s0 = inlined_call_operand.vmem [shape: f32[2,23,4], index: 0, kind: input, shape index: {}]
  %s1 = inlined_call_operand.vmem [shape: bf16[4,8], index: 1, kind: input, shape index: {}]
  %s2 = inlined_call_operand.vmem [shape: bf16[6,16,16], index: 2, kind: input, shape index: {}]
  %s3 = inlined_call_operand.vmem [shape: f32[6,1,16], index: 3, kind: input, shape index: {}]
  %s4 = inlined_call_operand.vmem [shape: bf16[6,8,8], index: 4, kind: input, shape index: {}]
  %s5 = inlined_call_operand.vmem [shape: f32[6,1,8], index: 5, kind: input, shape index: {}]
  %s6 = inlined_call_operand.vmem [shape: bf16[48,8], index: 6, kind: input, shape index: {}]
  %s7 = inlined_call_operand.vmem [shape: f32[1,8], index: 7, kind: input, shape index: {}]
  %s8 = inlined_call_operand.vmem [shape: bf16[8,4], index: 8, kind: input, shape index: {}]
  %s9 = inlined_call_operand.vmem [shape: bf16[4,128], index: 9, kind: input, shape index: {}]
  %s10 = inlined_call_operand.hbm [shape: f32[2,8,128], index: 10, kind: output, shape index: {}]
  %s11 = sld [smem:[#allocation0]]
  $region73: #{tpu_custom_call.1} parent=0
    _
  %s13 = ssub.s32 1, %s11
  %s14 = scalar_select 0, %s13, %s11
  $region1: #{tpu_custom_call.1} parent=0
    #allocation2 [shape = 'u8[8192]{0}', space=vmem, size = 0x2000, scoped, tag = 'output window, operand 0']
    #allocation3 [shape = 's32[2]{0}', space=sflag, size = 0x8, scoped, tag = 'scoped memory for tpu_custom_call.1']
    %15 = vsyncpa [#allocation3], 0
    %s16 = scalar_lea.sflag [#allocation3], 1
    %17 = vsyncpa %s16, 0
    loop: start=0, step=1, limit=4
    $region2: #{tpu_custom_call.1} parent=1 // loop_pre_header
      _
    $region3: #{tpu_custom_call.1} parent=1 // loop_header
      %s19 = sphi 0, %s23
      %p20 = scmp.ge.s32.totalorder %s19, 4
      %s29 = sphi 0, %s31
      %s32 = sphi 0, %s29
      %s33 = sphi 0, %s32
      %s49 = sphi 0, %s33
      %s53 = sphi 0, %s53
      %s55 = sphi 0, %s53
      %s56 = sphi 0, %s55
      %s70 = sphi 0, %s56
      %s74 = sphi 0, %s74
      %s76 = sphi 0, %s74
      %s77 = sphi 0, %s76
      %s91 = sphi 0, %s77
      %s95 = sphi 0, %s95
      %s97 = sphi 0, %s95
      %s98 = sphi 0, %s97
      %s112 = sphi 0, %s98
      %s116 = sphi 0, %s116
      %s118 = sphi 0, %s116
      %s119 = sphi 0, %s118
      %s133 = sphi 0, %s119
      %s137 = sphi 0, %s137
      %s139 = sphi 0, %s137
      %s140 = sphi 0, %s139
      %s154 = sphi 0, %s140
      %s158 = sphi 0, %s158
      %s160 = sphi 0, %s158
      %s161 = sphi 0, %s160
      %s175 = sphi 0, %s161
      %s179 = sphi 0, %s179
      %s181 = sphi 0, %s179
      %s182 = sphi 0, %s181
      %s196 = sphi 0, %s182
      %s200 = sphi 0, %s200
      %s202 = sphi 0, %s200
      %s203 = sphi 0, %s202
      %s217 = sphi 0, %s203
      %s221 = sphi 0, %s221
      %s223 = sphi 0, %s221
      %s224 = sphi 0, %s223
      %s238 = sphi 0, %s224
      %s244 = sphi 0, %s246
      %s247 = sphi 0, %s244
      %s248 = sphi 0, %s247
      %s264 = sphi 0, %s248
    $region4: #{tpu_custom_call.1} parent=1 // loop_header_branch
      %22 = sbr.rel (%p20) target = $region8
    $region5: #{tpu_custom_call.1} parent=1 // loop_body
      %s24 = ssub.s32 %s19, 1
      %s25 = ssub.s32 %s19, 2
      %s26 = sadd.s32 %s19, 1
      %s27 = ssub.s32 %s19, %s26
      %p28 = scmp.eq.s32.totalorder %s27, 0
      %s30 = sadd.s32 %s29, 1
      %s31 = scalar_select %p28, %s29, %s30
      %p34 = pneg %p28
      %p35 = scmp.eq.s32.totalorder %s19, 1
      %p36 = por %p34, %p35
      %p37 = scmp.ne.s32.totalorder %s29, %s32
      %p38 = scmp.eq.s32.totalorder %s19, 0
      %p39 = por %p37, %p38
      %p40 = scmp.ne.s32.totalorder %s29, %s32
      %p41 = scmp.eq.s32.totalorder %s24, 1
      %p42 = por %p40, %p41
      %p43 = scmp.ne.s32.totalorder %s32, %s33
      %p44 = scmp.eq.s32.totalorder %s24, 0
      %p45 = por %p43, %p44
      %p46 = scmp.ne.s32.totalorder %s32, %s33
      %p47 = scmp.eq.s32.totalorder %s25, 1
      %p48 = por %p46, %p47
      %p50 = scmp.ne.s32.totalorder %s33, %s49
      %p51 = scmp.eq.s32.totalorder %s25, 0
      %p52 = por %p50, %p51
      %s54 = sadd.s32 %s53, 1
      %p57 = scmp.eq.s32.totalorder %s19, 1
      %p58 = scmp.ne.s32.totalorder %s53, %s55
      %p59 = scmp.eq.s32.totalorder %s19, 0
      %p60 = por %p58, %p59
      %p61 = scmp.ne.s32.totalorder %s53, %s55
      %p62 = scmp.eq.s32.totalorder %s24, 1
      %p63 = por %p61, %p62
      %p64 = scmp.ne.s32.totalorder %s55, %s56
      %p65 = scmp.eq.s32.totalorder %s24, 0
      %p66 = por %p64, %p65
      %p67 = scmp.ne.s32.totalorder %s55, %s56
      %p68 = scmp.eq.s32.totalorder %s25, 1
      %p69 = por %p67, %p68
      %p71 = scmp.ne.s32.totalorder %s56, %s70
      %p72 = scmp.eq.s32.totalorder %s25, 0
      %p73 = por %p71, %p72
      %s75 = sadd.s32 %s74, 1
      %p78 = scmp.eq.s32.totalorder %s19, 1
      %p79 = scmp.ne.s32.totalorder %s74, %s76
      %p80 = scmp.eq.s32.totalorder %s19, 0
      %p81 = por %p79, %p80
      %p82 = scmp.ne.s32.totalorder %s74, %s76
      %p83 = scmp.eq.s32.totalorder %s24, 1
      %p84 = por %p82, %p83
      %p85 = scmp.ne.s32.totalorder %s76, %s77
      %p86 = scmp.eq.s32.totalorder %s24, 0
      %p87 = por %p85, %p86
      %p88 = scmp.ne.s32.totalorder %s76, %s77
      %p89 = scmp.eq.s32.totalorder %s25, 1
      %p90 = por %p88, %p89
      %p92 = scmp.ne.s32.totalorder %s77, %s91
      %p93 = scmp.eq.s32.totalorder %s25, 0
      %p94 = por %p92, %p93
      %s96 = sadd.s32 %s95, 1
      %p99 = scmp.eq.s32.totalorder %s19, 1
      %p100 = scmp.ne.s32.totalorder %s95, %s97
      %p101 = scmp.eq.s32.totalorder %s19, 0
      %p102 = por %p100, %p101
      %p103 = scmp.ne.s32.totalorder %s95, %s97
      %p104 = scmp.eq.s32.totalorder %s24, 1
      %p105 = por %p103, %p104
      %p106 = scmp.ne.s32.totalorder %s97, %s98
      %p107 = scmp.eq.s32.totalorder %s24, 0
      %p108 = por %p106, %p107
      %p109 = scmp.ne.s32.totalorder %s97, %s98
      %p110 = scmp.eq.s32.totalorder %s25, 1
      %p111 = por %p109, %p110
      %p113 = scmp.ne.s32.totalorder %s98, %s112
      %p114 = scmp.eq.s32.totalorder %s25, 0
      %p115 = por %p113, %p114
      %s117 = sadd.s32 %s116, 1
      %p120 = scmp.eq.s32.totalorder %s19, 1
      %p121 = scmp.ne.s32.totalorder %s116, %s118
      %p122 = scmp.eq.s32.totalorder %s19, 0
      %p123 = por %p121, %p122
      %p124 = scmp.ne.s32.totalorder %s116, %s118
      %p125 = scmp.eq.s32.totalorder %s24, 1
      %p126 = por %p124, %p125
      %p127 = scmp.ne.s32.totalorder %s118, %s119
      %p128 = scmp.eq.s32.totalorder %s24, 0
      %p129 = por %p127, %p128
      %p130 = scmp.ne.s32.totalorder %s118, %s119
      %p131 = scmp.eq.s32.totalorder %s25, 1
      %p132 = por %p130, %p131
      %p134 = scmp.ne.s32.totalorder %s119, %s133
      %p135 = scmp.eq.s32.totalorder %s25, 0
      %p136 = por %p134, %p135
      %s138 = sadd.s32 %s137, 1
      %p141 = scmp.eq.s32.totalorder %s19, 1
      %p142 = scmp.ne.s32.totalorder %s137, %s139
      %p143 = scmp.eq.s32.totalorder %s19, 0
      %p144 = por %p142, %p143
      %p145 = scmp.ne.s32.totalorder %s137, %s139
      %p146 = scmp.eq.s32.totalorder %s24, 1
      %p147 = por %p145, %p146
      %p148 = scmp.ne.s32.totalorder %s139, %s140
      %p149 = scmp.eq.s32.totalorder %s24, 0
      %p150 = por %p148, %p149
      %p151 = scmp.ne.s32.totalorder %s139, %s140
      %p152 = scmp.eq.s32.totalorder %s25, 1
      %p153 = por %p151, %p152
      %p155 = scmp.ne.s32.totalorder %s140, %s154
      %p156 = scmp.eq.s32.totalorder %s25, 0
      %p157 = por %p155, %p156
      %s159 = sadd.s32 %s158, 1
      %p162 = scmp.eq.s32.totalorder %s19, 1
      %p163 = scmp.ne.s32.totalorder %s158, %s160
      %p164 = scmp.eq.s32.totalorder %s19, 0
      %p165 = por %p163, %p164
      %p166 = scmp.ne.s32.totalorder %s158, %s160
      %p167 = scmp.eq.s32.totalorder %s24, 1
      %p168 = por %p166, %p167
      %p169 = scmp.ne.s32.totalorder %s160, %s161
      %p170 = scmp.eq.s32.totalorder %s24, 0
      %p171 = por %p169, %p170
      %p172 = scmp.ne.s32.totalorder %s160, %s161
      %p173 = scmp.eq.s32.totalorder %s25, 1
      %p174 = por %p172, %p173
      %p176 = scmp.ne.s32.totalorder %s161, %s175
      %p177 = scmp.eq.s32.totalorder %s25, 0
      %p178 = por %p176, %p177
      %s180 = sadd.s32 %s179, 1
      %p183 = scmp.eq.s32.totalorder %s19, 1
      %p184 = scmp.ne.s32.totalorder %s179, %s181
      %p185 = scmp.eq.s32.totalorder %s19, 0
      %p186 = por %p184, %p185
      %p187 = scmp.ne.s32.totalorder %s179, %s181
      %p188 = scmp.eq.s32.totalorder %s24, 1
      %p189 = por %p187, %p188
      %p190 = scmp.ne.s32.totalorder %s181, %s182
      %p191 = scmp.eq.s32.totalorder %s24, 0
      %p192 = por %p190, %p191
      %p193 = scmp.ne.s32.totalorder %s181, %s182
      %p194 = scmp.eq.s32.totalorder %s25, 1
      %p195 = por %p193, %p194
      %p197 = scmp.ne.s32.totalorder %s182, %s196
      %p198 = scmp.eq.s32.totalorder %s25, 0
      %p199 = por %p197, %p198
      %s201 = sadd.s32 %s200, 1
      %p204 = scmp.eq.s32.totalorder %s19, 1
      %p205 = scmp.ne.s32.totalorder %s200, %s202
      %p206 = scmp.eq.s32.totalorder %s19, 0
      %p207 = por %p205, %p206
      %p208 = scmp.ne.s32.totalorder %s200, %s202
      %p209 = scmp.eq.s32.totalorder %s24, 1
      %p210 = por %p208, %p209
      %p211 = scmp.ne.s32.totalorder %s202, %s203
      %p212 = scmp.eq.s32.totalorder %s24, 0
      %p213 = por %p211, %p212
      %p214 = scmp.ne.s32.totalorder %s202, %s203
      %p215 = scmp.eq.s32.totalorder %s25, 1
      %p216 = por %p214, %p215
      %p218 = scmp.ne.s32.totalorder %s203, %s217
      %p219 = scmp.eq.s32.totalorder %s25, 0
      %p220 = por %p218, %p219
      %s222 = sadd.s32 %s221, 1
      %p225 = scmp.eq.s32.totalorder %s19, 1
      %p226 = scmp.ne.s32.totalorder %s221, %s223
      %p227 = scmp.eq.s32.totalorder %s19, 0
      %p228 = por %p226, %p227
      %p229 = scmp.ne.s32.totalorder %s221, %s223
      %p230 = scmp.eq.s32.totalorder %s24, 1
      %p231 = por %p229, %p230
      %p232 = scmp.ne.s32.totalorder %s223, %s224
      %p233 = scmp.eq.s32.totalorder %s24, 0
      %p234 = por %p232, %p233
      %p235 = scmp.ne.s32.totalorder %s223, %s224
      %p236 = scmp.eq.s32.totalorder %s25, 1
      %p237 = por %p235, %p236
      %p239 = scmp.ne.s32.totalorder %s224, %s238
      %p240 = scmp.eq.s32.totalorder %s25, 0
      %p241 = por %p239, %p240
      %s242 = ssub.s32 %s19, %s26
      %p243 = scmp.eq.s32.totalorder %s242, 0
      %s245 = sadd.s32 %s244, 1
      %s246 = scalar_select %p243, %s244, %s245
      %p249 = pneg %p243
      %p250 = scmp.eq.s32.totalorder %s19, 1
      %p251 = por %p249, %p250
      %p252 = scmp.ne.s32.totalorder %s244, %s247
      %p253 = scmp.eq.s32.totalorder %s19, 0
      %p254 = por %p252, %p253
      %p255 = scmp.ne.s32.totalorder %s244, %s247
      %p256 = scmp.eq.s32.totalorder %s24, 1
      %p257 = por %p255, %p256
      %p258 = scmp.ne.s32.totalorder %s247, %s248
      %p259 = scmp.eq.s32.totalorder %s24, 0
      %p260 = por %p258, %p259
      %p261 = scmp.ne.s32.totalorder %s247, %s248
      %p262 = scmp.eq.s32.totalorder %s25, 1
      %p263 = por %p261, %p262
      %p265 = scmp.ne.s32.totalorder %s248, %s264
      %p266 = scmp.eq.s32.totalorder %s25, 0
      %p267 = por %p265, %p266
      %p268 = scmp.le.s32.totalorder 1, %s19
      %p269 = scmp.lt.s32.totalorder %s19, 3
      %p270 = pnand %p268, %p269
      %p271 = pneg %p270
      // Predicated region
      $region9: #{tpu_custom_call.1} parent=5 // pred_check
        _
      $region10: #{tpu_custom_call.1} parent=5 // pred_check_branch
        %273 = sbr.rel (%p270) target = $region12
      $region11: #{tpu_custom_call.1} parent=5 // pred_region
        %s274 = ssub.s32 %s19, 1
        // Predicated region
        $region13: #{tpu_custom_call.1} parent=11 // pred_check
          %p275 = pneg %p66
        $region14: #{tpu_custom_call.1} parent=11 // pred_check_branch
          %277 = sbr.rel (%p275) target = $region16
        $region15: #{tpu_custom_call.1} parent=11 // pred_region
          _
        $region16: #{tpu_custom_call.1} parent=11 // pred_fallthru
          _
        // Predicated region
        $region17: #{tpu_custom_call.1} parent=11 // pred_check
          %p278 = pneg %p87
        $region18: #{tpu_custom_call.1} parent=11 // pred_check_branch
          %280 = sbr.rel (%p278) target = $region20
        $region19: #{tpu_custom_call.1} parent=11 // pred_region
          _
        $region20: #{tpu_custom_call.1} parent=11 // pred_fallthru
          _
        // Predicated region
        $region21: #{tpu_custom_call.1} parent=11 // pred_check
          %p281 = pneg %p108
        $region22: #{tpu_custom_call.1} parent=11 // pred_check_branch
          %283 = sbr.rel (%p281) target = $region24
        $region23: #{tpu_custom_call.1} parent=11 // pred_region
          _
        $region24: #{tpu_custom_call.1} parent=11 // pred_fallthru
          _
        // Predicated region
        $region25: #{tpu_custom_call.1} parent=11 // pred_check
          %p284 = pneg %p129
        $region26: #{tpu_custom_call.1} parent=11 // pred_check_branch
          %286 = sbr.rel (%p284) target = $region28
        $region27: #{tpu_custom_call.1} parent=11 // pred_region
          _
        $region28: #{tpu_custom_call.1} parent=11 // pred_fallthru
          _
        // Predicated region
        $region29: #{tpu_custom_call.1} parent=11 // pred_check
          %p287 = pneg %p150
        $region30: #{tpu_custom_call.1} parent=11 // pred_check_branch
          %289 = sbr.rel (%p287) target = $region32
        $region31: #{tpu_custom_call.1} parent=11 // pred_region
          _
        $region32: #{tpu_custom_call.1} parent=11 // pred_fallthru
          _
        // Predicated region
        $region33: #{tpu_custom_call.1} parent=11 // pred_check
          %p290 = pneg %p171
        $region34: #{tpu_custom_call.1} parent=11 // pred_check_branch
          %292 = sbr.rel (%p290) target = $region36
        $region35: #{tpu_custom_call.1} parent=11 // pred_region
          _
        $region36: #{tpu_custom_call.1} parent=11 // pred_fallthru
          _
        // Predicated region
        $region37: #{tpu_custom_call.1} parent=11 // pred_check
          %p293 = pneg %p192
        $region38: #{tpu_custom_call.1} parent=11 // pred_check_branch
          %295 = sbr.rel (%p293) target = $region40
        $region39: #{tpu_custom_call.1} parent=11 // pred_region
          _
        $region40: #{tpu_custom_call.1} parent=11 // pred_fallthru
          _
        // Predicated region
        $region41: #{tpu_custom_call.1} parent=11 // pred_check
          %p296 = pneg %p213
        $region42: #{tpu_custom_call.1} parent=11 // pred_check_branch
          %298 = sbr.rel (%p296) target = $region44
        $region43: #{tpu_custom_call.1} parent=11 // pred_region
          _
        $region44: #{tpu_custom_call.1} parent=11 // pred_fallthru
          _
        // Predicated region
        $region45: #{tpu_custom_call.1} parent=11 // pred_check
          %p299 = pneg %p234
        $region46: #{tpu_custom_call.1} parent=11 // pred_check_branch
          %301 = sbr.rel (%p299) target = $region48
        $region47: #{tpu_custom_call.1} parent=11 // pred_region
          _
        $region48: #{tpu_custom_call.1} parent=11 // pred_fallthru
          _
      $region12: #{tpu_custom_call.1} parent=5 // pred_fallthru
        _
      %p302 = scmp.lt.s32.totalorder %s19, 2
      // Predicated region
      $region49: #{tpu_custom_call.1} parent=5 // pred_check
        %p303 = pneg %p302
      $region50: #{tpu_custom_call.1} parent=5 // pred_check_branch
        %305 = sbr.rel (%p303) target = $region52
      $region51: #{tpu_custom_call.1} parent=5 // pred_region
        // Predicated region
        $region53: #{tpu_custom_call.1} parent=51 // pred_check
          %p306 = pneg %p39
        $region54: #{tpu_custom_call.1} parent=51 // pred_check_branch
          %308 = sbr.rel (%p306) target = $region56
        $region55: #{tpu_custom_call.1} parent=51 // pred_region
          %p309 = scmp.lt.s32.totalorder %s19, 1
          %s310 = scalar_select %p309, %s19, 1
          %s311 = smul.addr %s310, 3
          %s312 = smul.addr %s311, 8
          %s313 = scalar_lea.vmem %s0, %s312
        $region56: #{tpu_custom_call.1} parent=51 // pred_fallthru
          _
      $region52: #{tpu_custom_call.1} parent=5 // pred_fallthru
        _
      %p314 = scmp.le.s32.totalorder 1, %s19
      %p315 = scmp.lt.s32.totalorder %s19, 3
      %p316 = pnand %p314, %p315
      %p317 = pneg %p316
      // Predicated region
      $region57: #{tpu_custom_call.1} parent=5 // pred_check
        _
      $region58: #{tpu_custom_call.1} parent=5 // pred_check_branch
        %319 = sbr.rel (%p316) target = $region60
      $region59: #{tpu_custom_call.1} parent=5 // pred_region
        %s320 = ssub.s32 %s19, 1
        %p321 = scmp.lt.s32.totalorder %s24, 1
        %s322 = scalar_select %p321, %s24, 1
        %s323 = smul.addr %s322, 3
        %s324 = smul.addr %s323, 8
        %s325 = scalar_lea.vmem %s0, %s324
        %p326 = pneg %p45
        %p327 = pneg %p42
        %p328 = pneg %p66
        %p329 = pneg %p63
        %p330 = pneg %p87
        %p331 = pneg %p84
        %p332 = pneg %p108
        %p333 = pneg %p105
        %p334 = pneg %p129
        %p335 = pneg %p126
        %p336 = pneg %p150
        %p337 = pneg %p147
        %p338 = pneg %p171
        %p339 = pneg %p168
        %p340 = pneg %p192
        %p341 = pneg %p189
        %p342 = pneg %p213
        %p343 = pneg %p210
        %p344 = pneg %p234
        %p345 = pneg %p231
        %p346 = pneg %p260
        %p347 = pneg %p257
        %s348 = sand.u32 %s247, 1
        %s349 = scalar_lea.sflag [#allocation3], %s348
        %s350 = sand.u32 %s247, 1
        %s351 = smul.addr %s350, 8
        %s352 = scalar_lea.vmem [#allocation2], %s351
        %p353 = scmp.lt.s32.totalorder %s24, 1
        %s354 = scalar_select %p353, %s24, 1
        %s355 = smul.addr %s354, 3
        %s356 = smul.addr %s355, 8
        %s357 = scalar_lea.vmem %s0, %s356
        %v359 = vld [vmem:[%s357] sm:$0xff]
        %v360 = vld [vmem:[%s357 + $0x8] sm:$0xff]
        %v361 = vld [vmem:[%s357 + $0x10] sm:$0x7f]
        %v362 = vpack.c.bf16 %v360, %v359
        %v363 = vpack.c.bf16 %v361, %v361
        %v364 = vld [vmem:[%s1] sm:$0x3]
        %vm365 = vcmask 31744
        %v367 = vsel %vm365, %v362, 0
        %v370 = vsel %vm365, %v363, 0
        %vm372 = vcmask 1041408
        %v374 = vsel %vm372, %v364, 0
        %376 = vmatprep.subr.bf16.mxu0 0
        %377 = vmatpush1.bf16.msra.mxu0 %v374
        %378 = vmatprep.subr.bf16.mxu0 0
        %379 = vmatpush1.bf16.msra.mxu0 0
        %380 = vmatprep.subr.bf16.mxu0 0
        %381 = vmatpush1.bf16.msra.mxu0 0
        %382 = vmatprep.subr.bf16.mxu0 0
        %383 = vmatpush1.bf16.msra.mxu0 0
        %384 = vmatprep.subr.bf16.mxu0 0
        %385 = vmatpush1.bf16.msra.mxu0 0
        %386 = vmatprep.subr.bf16.mxu0 0
        %387 = vmatpush1.bf16.msra.mxu0 0
        %388 = vmatprep.subr.bf16.mxu0 0
        %389 = vmatpush1.bf16.msra.mxu0 0
        %390 = vmatprep.subr.bf16.mxu0 0
        %391 = vmatpush1.bf16.msra.mxu0 0
        %392 = vmatprep.subr.bf16.mxu0 0
        %393 = vmatpush1.bf16.msra.mxu0 0
        %394 = vmatprep.subr.bf16.mxu0 0
        %395 = vmatpush1.bf16.msra.mxu0 0
        %396 = vmatprep.subr.bf16.mxu0 0
        %397 = vmatpush1.bf16.msra.mxu0 0
        %398 = vmatprep.subr.bf16.mxu0 0
        %399 = vmatpush1.bf16.msra.mxu0 0
        %400 = vmatprep.subr.bf16.mxu0 0
        %401 = vmatpush1.bf16.msra.mxu0 0
        %402 = vmatprep.subr.bf16.mxu0 0
        %403 = vmatpush1.bf16.msra.mxu0 0
        %404 = vmatprep.subr.bf16.mxu0 0
        %405 = vmatpush1.bf16.msra.mxu0 0
        %406 = vmatprep.subr.bf16.mxu0 0
        %407 = vmatpush1.bf16.msra.mxu0 0
        %408 = vmatprep.mubr.bf16.mxu0 0
        %409 = vmatmul.mubr.bf16.gmra.mrb[0].mxu0 %v367
        %v410 = vpop.f32.mrb[0].mxu0
        %v411 = vadd.f32 0.0, %v410
        %v412 = vpop.f32.mrb[0].mxu0
        %v413 = vpop.f32.mrb[0].mxu0
        %v414 = vadd.f32 0.0, %v413
        %v415 = vpop.f32.mrb[0].mxu0
        %416 = vmatprep.mubr.bf16.mxu0 0
        %417 = vmatmul.mubr.bf16.gmra.mrb[0].mxu0 %v370
        %v418 = vpop.f32.mrb[0].mxu0
        %v419 = vadd.f32 0.0, %v418
        %v420 = vpop.f32.mrb[0].mxu0
        %v421 = vpop.f32.mrb[0].mxu0
        %v422 = vpop.f32.mrb[0].mxu0
        %423 = vdwg.mxu0
        %v424 = vld [vmem:[%s2] sm:$0xf]
        %v425 = vld [vmem:[%s2 + $0x4] sm:$0xf]
        %vm429 = vcmask 1040384
        %v430 = vrot.slane %v411, 7
        %v431 = vrot.slane %v414, 7
        %v432 = vsel %vm429, %v430, %v431
        %v433 = vrot.slane %v419, 7
        %v434 = vsel %vm429, %v431, %v433
        %v438 = vsel %vm429, 0.0, %v430
        %439 = vrot.lane.b32.xlu0 %v411, 8
        %v440 = vpop.permute.xlu0 %439
        %441 = vrot.lane.b32.xlu0 %v414, 8
        %v442 = vpop.permute.xlu0 %441
        %443 = vrot.lane.b32.xlu0 %v419, 8
        %v444 = vpop.permute.xlu0 %443
        %vm448 = vcmask 64512
        %v449 = vsel %vm448, %v438, %v440
        %v450 = vsel %vm448, %v432, %v442
        %v451 = vsel %vm448, %v434, %v444
        %v452 = vpack.c.bf16 %v450, %v449
        %v453 = vpack.c.bf16 %v451, %v451
        %v454 = vld [vmem:[%s3] sm:$0x1]
        %v456 = vlaneseq
        %v457 = vshrl.u32 %v456, 7
        %v458 = vsub.s32 0, %v457
        %v459 = vrot.slane %v454, %v458
        %v463 = vunpack.c.l.b16 %v424
        %v464 = vunpack.c.l.b16 %v425
        %v465 = vpack.c.b16 %v464, %v463
        %vm467 = vcmask 130048
        %v469 = vsel %vm467, %v452, 0
        %v472 = vsel %vm467, %v453, 0
        %474 = vmatprep.subr.bf16.mxu0 0
        %475 = vmatpush1.bf16.msra.mxu0 %v465
        %476 = vmatprep.subr.bf16.mxu0 0
        %477 = vmatpush1.bf16.msra.mxu0 0
        %478 = vmatprep.subr.bf16.mxu0 0
        %479 = vmatpush1.bf16.msra.mxu0 0
        %480 = vmatprep.subr.bf16.mxu0 0
        %481 = vmatpush1.bf16.msra.mxu0 0
        %482 = vmatprep.subr.bf16.mxu0 0
        %483 = vmatpush1.bf16.msra.mxu0 0
        %484 = vmatprep.subr.bf16.mxu0 0
        %485 = vmatpush1.bf16.msra.mxu0 0
        %486 = vmatprep.subr.bf16.mxu0 0
        %487 = vmatpush1.bf16.msra.mxu0 0
        %488 = vmatprep.subr.bf16.mxu0 0
        %489 = vmatpush1.bf16.msra.mxu0 0
        %490 = vmatprep.subr.bf16.mxu0 0
        %491 = vmatpush1.bf16.msra.mxu0 0
        %492 = vmatprep.subr.bf16.mxu0 0
        %493 = vmatpush1.bf16.msra.mxu0 0
        %494 = vmatprep.subr.bf16.mxu0 0
        %495 = vmatpush1.bf16.msra.mxu0 0
        %496 = vmatprep.subr.bf16.mxu0 0
        %497 = vmatpush1.bf16.msra.mxu0 0
        %498 = vmatprep.subr.bf16.mxu0 0
        %499 = vmatpush1.bf16.msra.mxu0 0
        %500 = vmatprep.subr.bf16.mxu0 0
        %501 = vmatpush1.bf16.msra.mxu0 0
        %502 = vmatprep.subr.bf16.mxu0 0
        %503 = vmatpush1.bf16.msra.mxu0 0
        %504 = vmatprep.subr.bf16.mxu0 0
        %505 = vmatpush1.bf16.msra.mxu0 0
        %506 = vmatprep.mubr.bf16.mxu0 0
        %507 = vmatmul.mubr.bf16.gmra.mrb[0].mxu0 %v469
        %v508 = vpop.f32.mrb[0].mxu0
        %v509 = vadd.f32 %v459, %v508
        %v510 = vpop.f32.mrb[0].mxu0
        %v511 = vpop.f32.mrb[0].mxu0
        %v512 = vadd.f32 %v459, %v511
        %v513 = vpop.f32.mrb[0].mxu0
        %514 = vmatprep.mubr.bf16.mxu0 0
        %515 = vmatmul.mubr.bf16.gmra.mrb[0].mxu0 %v472
        %v516 = vpop.f32.mrb[0].mxu0
        %v517 = vadd.f32 %v459, %v516
        %v518 = vpop.f32.mrb[0].mxu0
        %v519 = vpop.f32.mrb[0].mxu0
        %v520 = vpop.f32.mrb[0].mxu0
        %521 = vdwg.mxu0
        %v522 = vtanh.pop %v509
        %v523 = vtanh.pop %v512
        %v524 = vtanh.pop %v517
        %v525 = vxor.u32 %v509, 2147483648
        %v526 = vxor.u32 %v512, 2147483648
        %v527 = vxor.u32 %v517, 2147483648
        %v528 = vmul.f32 %v525, 1.442695
        %v529 = vpow.pop %v528
        %v530 = vmul.f32 %v526, 1.442695
        %v531 = vpow.pop %v530
        %v532 = vmul.f32 %v527, 1.442695
        %v533 = vpow.pop %v532
        %v534 = vadd.f32 %v529, 1.0
        %v535 = vadd.f32 %v531, 1.0
        %v536 = vadd.f32 %v533, 1.0
        %v537 = vrcp.pop %v534
        %v538 = vmul.f32 1.0, %v537
        %v539 = vrcp.pop %v535
        %v540 = vmul.f32 1.0, %v539
        %v541 = vrcp.pop %v536
        %v542 = vmul.f32 1.0, %v541
        %546 = vrot.lane.b32.xlu0 %v538, 120
        %v547 = vpop.permute.xlu0 %546
        %548 = vrot.lane.b32.xlu0 %v540, 120
        %v549 = vpop.permute.xlu0 %548
        %550 = vrot.lane.b32.xlu0 %v542, 120
        %v551 = vpop.permute.xlu0 %550
        %v555 = vmul.f32 %v522, %v547
        %v556 = vmul.f32 %v523, %v549
        %v557 = vmul.f32 %v524, %v551
        %v558 = vpack.c.bf16 %v556, %v555
        %v559 = vpack.c.bf16 %v557, %v557
        %v560 = vld [vmem:[%s4] sm:$0xf]
        %v562 = vsel %vm448, %v558, 0
        %v565 = vsel %vm448, %v559, 0
        %vm567 = vcmask 1043456
        %v569 = vsel %vm567, %v560, 0
        %571 = vmatprep.subr.bf16.mxu0 0
        %572 = vmatpush1.bf16.msra.mxu0 %v569
        %573 = vmatprep.subr.bf16.mxu0 0
        %574 = vmatpush1.bf16.msra.mxu0 0
        %575 = vmatprep.subr.bf16.mxu0 0
        %576 = vmatpush1.bf16.msra.mxu0 0
        %577 = vmatprep.subr.bf16.mxu0 0
        %578 = vmatpush1.bf16.msra.mxu0 0
        %579 = vmatprep.subr.bf16.mxu0 0
        %580 = vmatpush1.bf16.msra.mxu0 0
        %581 = vmatprep.subr.bf16.mxu0 0
        %582 = vmatpush1.bf16.msra.mxu0 0
        %583 = vmatprep.subr.bf16.mxu0 0
        %584 = vmatpush1.bf16.msra.mxu0 0
        %585 = vmatprep.subr.bf16.mxu0 0
        %586 = vmatpush1.bf16.msra.mxu0 0
        %587 = vmatprep.subr.bf16.mxu0 0
        %588 = vmatpush1.bf16.msra.mxu0 0
        %589 = vmatprep.subr.bf16.mxu0 0
        %590 = vmatpush1.bf16.msra.mxu0 0
        %591 = vmatprep.subr.bf16.mxu0 0
        %592 = vmatpush1.bf16.msra.mxu0 0
        %593 = vmatprep.subr.bf16.mxu0 0
        %594 = vmatpush1.bf16.msra.mxu0 0
        %595 = vmatprep.subr.bf16.mxu0 0
        %596 = vmatpush1.bf16.msra.mxu0 0
        %597 = vmatprep.subr.bf16.mxu0 0
        %598 = vmatpush1.bf16.msra.mxu0 0
        %599 = vmatprep.subr.bf16.mxu0 0
        %600 = vmatpush1.bf16.msra.mxu0 0
        %601 = vmatprep.subr.bf16.mxu0 0
        %602 = vmatpush1.bf16.msra.mxu0 0
        %603 = vmatprep.mubr.bf16.mxu0 0
        %604 = vmatmul.mubr.bf16.gmra.mrb[0].mxu0 %v562
        %v605 = vpop.f32.mrb[0].mxu0
        %v606 = vadd.f32 0.0, %v605
        %v607 = vpop.f32.mrb[0].mxu0
        %v608 = vpop.f32.mrb[0].mxu0
        %v609 = vadd.f32 0.0, %v608
        %v610 = vpop.f32.mrb[0].mxu0
        %611 = vmatprep.mubr.bf16.mxu0 0
        %612 = vmatmul.mubr.bf16.gmra.mrb[0].mxu0 %v565
        %v613 = vpop.f32.mrb[0].mxu0
        %v614 = vadd.f32 0.0, %v613
        %v615 = vpop.f32.mrb[0].mxu0
        %v616 = vpop.f32.mrb[0].mxu0
        %v617 = vpop.f32.mrb[0].mxu0
        %618 = vdwg.mxu0
        %v619 = vadd.f32 %v411, %v606
        %v620 = vadd.f32 %v414, %v609
        %v621 = vadd.f32 %v419, %v614
        %v622 = vld [vmem:[%s5] sm:$0x1]
        %v624 = vlaneseq
        %v625 = vshrl.u32 %v624, 7
        %v626 = vsub.s32 0, %v625
        %v627 = vrot.slane %v622, %v626
        %v629 = vadd.f32 %v619, %v627
        %v630 = vadd.f32 %v620, %v627
        %v631 = vadd.f32 %v621, %v627
        %s632 = scalar_lea.vmem %s2, 8
        %v633 = vld [vmem:[%s632] sm:$0xf]
        %v634 = vld [vmem:[%s632 + $0x4] sm:$0xf]
        %v638 = vrot.slane %v629, 6
        %v639 = vrot.slane %v630, 6
        %v640 = vsel %vm372, %v638, %v639
        %v641 = vrot.slane %v631, 6
        %v642 = vsel %vm372, %v639, %v641
        %v646 = vsel %vm372, 0.0, %v638
        %647 = vrot.lane.b32.xlu0 %v629, 8
        %v648 = vpop.permute.xlu0 %647
        %649 = vrot.lane.b32.xlu0 %v630, 8
        %v650 = vpop.permute.xlu0 %649
        %651 = vrot.lane.b32.xlu0 %v631, 8
        %v652 = vpop.permute.xlu0 %651
        %v656 = vsel %vm448, %v646, %v648
        %v657 = vsel %vm448, %v640, %v650
        %v658 = vsel %vm448, %v642, %v652
        %v659 = vpack.c.bf16 %v657, %v656
        %v660 = vpack.c.bf16 %v658, %v658
        %s661 = scalar_lea.vmem %s3, 1
        %v662 = vld [vmem:[%s661] sm:$0x1]
        %v664 = vlaneseq
        %v665 = vshrl.u32 %v664, 7
        %v666 = vsub.s32 0, %v665
        %v667 = vrot.slane %v662, %v666
        %v671 = vunpack.c.l.b16 %v633
        %v672 = vunpack.c.l.b16 %v634
        %v673 = vpack.c.b16 %v672, %v671
        %v676 = vsel %vm467, %v659, 0
        %v679 = vsel %vm467, %v660, 0
        %681 = vmatprep.subr.bf16.mxu0 0
        %682 = vmatpush1.bf16.msra.mxu0 %v673
        %683 = vmatprep.subr.bf16.mxu0 0
        %684 = vmatpush1.bf16.msra.mxu0 0
        %685 = vmatprep.subr.bf16.mxu0 0
        %686 = vmatpush1.bf16.msra.mxu0 0
        %687 = vmatprep.subr.bf16.mxu0 0
        %688 = vmatpush1.bf16.msra.mxu0 0
        %689 = vmatprep.subr.bf16.mxu0 0
        %690 = vmatpush1.bf16.msra.mxu0 0
        %691 = vmatprep.subr.bf16.mxu0 0
        %692 = vmatpush1.bf16.msra.mxu0 0
        %693 = vmatprep.subr.bf16.mxu0 0
        %694 = vmatpush1.bf16.msra.mxu0 0
        %695 = vmatprep.subr.bf16.mxu0 0
        %696 = vmatpush1.bf16.msra.mxu0 0
        %697 = vmatprep.subr.bf16.mxu0 0
        %698 = vmatpush1.bf16.msra.mxu0 0
        %699 = vmatprep.subr.bf16.mxu0 0
        %700 = vmatpush1.bf16.msra.mxu0 0
        %701 = vmatprep.subr.bf16.mxu0 0
        %702 = vmatpush1.bf16.msra.mxu0 0
        %703 = vmatprep.subr.bf16.mxu0 0
        %704 = vmatpush1.bf16.msra.mxu0 0
        %705 = vmatprep.subr.bf16.mxu0 0
        %706 = vmatpush1.bf16.msra.mxu0 0
        %707 = vmatprep.subr.bf16.mxu0 0
        %708 = vmatpush1.bf16.msra.mxu0 0
        %709 = vmatprep.subr.bf16.mxu0 0
        %710 = vmatpush1.bf16.msra.mxu0 0
        %711 = vmatprep.subr.bf16.mxu0 0
        %712 = vmatpush1.bf16.msra.mxu0 0
        %713 = vmatprep.mubr.bf16.mxu0 0
        %714 = vmatmul.mubr.bf16.gmra.mrb[0].mxu0 %v676
        %v715 = vpop.f32.mrb[0].mxu0
        %v716 = vadd.f32 %v667, %v715
        %v717 = vpop.f32.mrb[0].mxu0
        %v718 = vpop.f32.mrb[0].mxu0
        %v719 = vadd.f32 %v667, %v718
        %v720 = vpop.f32.mrb[0].mxu0
        %721 = vmatprep.mubr.bf16.mxu0 0
        %722 = vmatmul.mubr.bf16.gmra.mrb[0].mxu0 %v679
        %v723 = vpop.f32.mrb[0].mxu0
        %v724 = vadd.f32 %v667, %v723
        %v725 = vpop.f32.mrb[0].mxu0
        %v726 = vpop.f32.mrb[0].mxu0
        %v727 = vpop.f32.mrb[0].mxu0
        %728 = vdwg.mxu0
        %v729 = vtanh.pop %v716
        %v730 = vtanh.pop %v719
        %v731 = vtanh.pop %v724
        %v732 = vxor.u32 %v716, 2147483648
        %v733 = vxor.u32 %v719, 2147483648
        %v734 = vxor.u32 %v724, 2147483648
        %v735 = vmul.f32 %v732, 1.442695
        %v736 = vpow.pop %v735
        %v737 = vmul.f32 %v733, 1.442695
        %v738 = vpow.pop %v737
        %v739 = vmul.f32 %v734, 1.442695
        %v740 = vpow.pop %v739
        %v741 = vadd.f32 %v736, 1.0
        %v742 = vadd.f32 %v738, 1.0
        %v743 = vadd.f32 %v740, 1.0
        %v744 = vrcp.pop %v741
        %v745 = vmul.f32 1.0, %v744
        %v746 = vrcp.pop %v742
        %v747 = vmul.f32 1.0, %v746
        %v748 = vrcp.pop %v743
        %v749 = vmul.f32 1.0, %v748
        %753 = vrot.lane.b32.xlu0 %v745, 120
        %v754 = vpop.permute.xlu0 %753
        %755 = vrot.lane.b32.xlu0 %v747, 120
        %v756 = vpop.permute.xlu0 %755
        %757 = vrot.lane.b32.xlu0 %v749, 120
        %v758 = vpop.permute.xlu0 %757
        %v762 = vmul.f32 %v729, %v754
        %v763 = vmul.f32 %v730, %v756
        %v764 = vmul.f32 %v731, %v758
        %v765 = vpack.c.bf16 %v763, %v762
        %v766 = vpack.c.bf16 %v764, %v764
        %s767 = scalar_lea.vmem %s4, 4
        %v768 = vld [vmem:[%s767] sm:$0xf]
        %v770 = vsel %vm448, %v765, 0
        %v773 = vsel %vm448, %v766, 0
        %v776 = vsel %vm567, %v768, 0
        %778 = vmatprep.subr.bf16.mxu0 0
        %779 = vmatpush1.bf16.msra.mxu0 %v776
        %780 = vmatprep.subr.bf16.mxu0 0
        %781 = vmatpush1.bf16.msra.mxu0 0
        %782 = vmatprep.subr.bf16.mxu0 0
        %783 = vmatpush1.bf16.msra.mxu0 0
        %784 = vmatprep.subr.bf16.mxu0 0
        %785 = vmatpush1.bf16.msra.mxu0 0
        %786 = vmatprep.subr.bf16.mxu0 0
        %787 = vmatpush1.bf16.msra.mxu0 0
        %788 = vmatprep.subr.bf16.mxu0 0
        %789 = vmatpush1.bf16.msra.mxu0 0
        %790 = vmatprep.subr.bf16.mxu0 0
        %791 = vmatpush1.bf16.msra.mxu0 0
        %792 = vmatprep.subr.bf16.mxu0 0
        %793 = vmatpush1.bf16.msra.mxu0 0
        %794 = vmatprep.subr.bf16.mxu0 0
        %795 = vmatpush1.bf16.msra.mxu0 0
        %796 = vmatprep.subr.bf16.mxu0 0
        %797 = vmatpush1.bf16.msra.mxu0 0
        %798 = vmatprep.subr.bf16.mxu0 0
        %799 = vmatpush1.bf16.msra.mxu0 0
        %800 = vmatprep.subr.bf16.mxu0 0
        %801 = vmatpush1.bf16.msra.mxu0 0
        %802 = vmatprep.subr.bf16.mxu0 0
        %803 = vmatpush1.bf16.msra.mxu0 0
        %804 = vmatprep.subr.bf16.mxu0 0
        %805 = vmatpush1.bf16.msra.mxu0 0
        %806 = vmatprep.subr.bf16.mxu0 0
        %807 = vmatpush1.bf16.msra.mxu0 0
        %808 = vmatprep.subr.bf16.mxu0 0
        %809 = vmatpush1.bf16.msra.mxu0 0
        %810 = vmatprep.mubr.bf16.mxu0 0
        %811 = vmatmul.mubr.bf16.gmra.mrb[0].mxu0 %v770
        %v812 = vpop.f32.mrb[0].mxu0
        %v813 = vadd.f32 0.0, %v812
        %v814 = vpop.f32.mrb[0].mxu0
        %v815 = vpop.f32.mrb[0].mxu0
        %v816 = vadd.f32 0.0, %v815
        %v817 = vpop.f32.mrb[0].mxu0
        %818 = vmatprep.mubr.bf16.mxu0 0
        %819 = vmatmul.mubr.bf16.gmra.mrb[0].mxu0 %v773
        %v820 = vpop.f32.mrb[0].mxu0
        %v821 = vadd.f32 0.0, %v820
        %v822 = vpop.f32.mrb[0].mxu0
        %v823 = vpop.f32.mrb[0].mxu0
        %v824 = vpop.f32.mrb[0].mxu0
        %825 = vdwg.mxu0
        %v826 = vadd.f32 %v629, %v813
        %v827 = vadd.f32 %v630, %v816
        %v828 = vadd.f32 %v631, %v821
        %s829 = scalar_lea.vmem %s5, 1
        %v830 = vld [vmem:[%s829] sm:$0x1]
        %v832 = vlaneseq
        %v833 = vshrl.u32 %v832, 7
        %v834 = vsub.s32 0, %v833
        %v835 = vrot.slane %v830, %v834
        %v837 = vadd.f32 %v826, %v835
        %v838 = vadd.f32 %v827, %v835
        %v839 = vadd.f32 %v828, %v835
        %s840 = scalar_lea.vmem %s2, 16
        %v841 = vld [vmem:[%s840] sm:$0xf]
        %v842 = vld [vmem:[%s840 + $0x4] sm:$0xf]
        %v846 = vrot.slane %v837, 4
        %v847 = vrot.slane %v838, 4
        %v848 = vsel %vm567, %v846, %v847
        %v849 = vrot.slane %v839, 4
        %v850 = vsel %vm567, %v847, %v849
        %v854 = vsel %vm567, 0.0, %v846
        %855 = vrot.lane.b32.xlu0 %v837, 8
        %v856 = vpop.permute.xlu0 %855
        %857 = vrot.lane.b32.xlu0 %v838, 8
        %v858 = vpop.permute.xlu0 %857
        %859 = vrot.lane.b32.xlu0 %v839, 8
        %v860 = vpop.permute.xlu0 %859
        %v864 = vsel %vm448, %v854, %v856
        %v865 = vsel %vm448, %v848, %v858
        %v866 = vsel %vm448, %v850, %v860
        %v867 = vpack.c.bf16 %v865, %v864
        %v868 = vpack.c.bf16 %v866, %v866
        %s869 = scalar_lea.vmem %s3, 2
        %v870 = vld [vmem:[%s869] sm:$0x1]
        %v872 = vlaneseq
        %v873 = vshrl.u32 %v872, 7
        %v874 = vsub.s32 0, %v873
        %v875 = vrot.slane %v870, %v874
        %v879 = vunpack.c.l.b16 %v841
        %v880 = vunpack.c.l.b16 %v842
        %v881 = vpack.c.b16 %v880, %v879
        %v884 = vsel %vm467, %v867, 0
        %v887 = vsel %vm467, %v868, 0
        %889 = vmatprep.subr.bf16.mxu0 0
        %890 = vmatpush1.bf16.msra.mxu0 %v881
        %891 = vmatprep.subr.bf16.mxu0 0
        %892 = vmatpush1.bf16.msra.mxu0 0
        %893 = vmatprep.subr.bf16.mxu0 0
        %894 = vmatpush1.bf16.msra.mxu0 0
        %895 = vmatprep.subr.bf16.mxu0 0
        %896 = vmatpush1.bf16.msra.mxu0 0
        %897 = vmatprep.subr.bf16.mxu0 0
        %898 = vmatpush1.bf16.msra.mxu0 0
        %899 = vmatprep.subr.bf16.mxu0 0
        %900 = vmatpush1.bf16.msra.mxu0 0
        %901 = vmatprep.subr.bf16.mxu0 0
        %902 = vmatpush1.bf16.msra.mxu0 0
        %903 = vmatprep.subr.bf16.mxu0 0
        %904 = vmatpush1.bf16.msra.mxu0 0
        %905 = vmatprep.subr.bf16.mxu0 0
        %906 = vmatpush1.bf16.msra.mxu0 0
        %907 = vmatprep.subr.bf16.mxu0 0
        %908 = vmatpush1.bf16.msra.mxu0 0
        %909 = vmatprep.subr.bf16.mxu0 0
        %910 = vmatpush1.bf16.msra.mxu0 0
        %911 = vmatprep.subr.bf16.mxu0 0
        %912 = vmatpush1.bf16.msra.mxu0 0
        %913 = vmatprep.subr.bf16.mxu0 0
        %914 = vmatpush1.bf16.msra.mxu0 0
        %915 = vmatprep.subr.bf16.mxu0 0
        %916 = vmatpush1.bf16.msra.mxu0 0
        %917 = vmatprep.subr.bf16.mxu0 0
        %918 = vmatpush1.bf16.msra.mxu0 0
        %919 = vmatprep.subr.bf16.mxu0 0
        %920 = vmatpush1.bf16.msra.mxu0 0
        %921 = vmatprep.mubr.bf16.mxu0 0
        %922 = vmatmul.mubr.bf16.gmra.mrb[0].mxu0 %v884
        %v923 = vpop.f32.mrb[0].mxu0
        %v924 = vadd.f32 %v875, %v923
        %v925 = vpop.f32.mrb[0].mxu0
        %v926 = vpop.f32.mrb[0].mxu0
        %v927 = vadd.f32 %v875, %v926
        %v928 = vpop.f32.mrb[0].mxu0
        %929 = vmatprep.mubr.bf16.mxu0 0
        %930 = vmatmul.mubr.bf16.gmra.mrb[0].mxu0 %v887
        %v931 = vpop.f32.mrb[0].mxu0
        %v932 = vadd.f32 %v875, %v931
        %v933 = vpop.f32.mrb[0].mxu0
        %v934 = vpop.f32.mrb[0].mxu0
        %v935 = vpop.f32.mrb[0].mxu0
        %936 = vdwg.mxu0
        %v937 = vtanh.pop %v924
        %v938 = vtanh.pop %v927
        %v939 = vtanh.pop %v932
        %v940 = vxor.u32 %v924, 2147483648
        %v941 = vxor.u32 %v927, 2147483648
        %v942 = vxor.u32 %v932, 2147483648
        %v943 = vmul.f32 %v940, 1.442695
        %v944 = vpow.pop %v943
        %v945 = vmul.f32 %v941, 1.442695
        %v946 = vpow.pop %v945
        %v947 = vmul.f32 %v942, 1.442695
        %v948 = vpow.pop %v947
        %v949 = vadd.f32 %v944, 1.0
        %v950 = vadd.f32 %v946, 1.0
        %v951 = vadd.f32 %v948, 1.0
        %v952 = vrcp.pop %v949
        %v953 = vmul.f32 1.0, %v952
        %v954 = vrcp.pop %v950
        %v955 = vmul.f32 1.0, %v954
        %v956 = vrcp.pop %v951
        %v957 = vmul.f32 1.0, %v956
        %961 = vrot.lane.b32.xlu0 %v953, 120
        %v962 = vpop.permute.xlu0 %961
        %963 = vrot.lane.b32.xlu0 %v955, 120
        %v964 = vpop.permute.xlu0 %963
        %965 = vrot.lane.b32.xlu0 %v957, 120
        %v966 = vpop.permute.xlu0 %965
        %v970 = vmul.f32 %v937, %v962
        %v971 = vmul.f32 %v938, %v964
        %v972 = vmul.f32 %v939, %v966
        %v973 = vpack.c.bf16 %v971, %v970
        %v974 = vpack.c.bf16 %v972, %v972
        %s975 = scalar_lea.vmem %s4, 8
        %v976 = vld [vmem:[%s975] sm:$0xf]
        %v978 = vsel %vm448, %v973, 0
        %v981 = vsel %vm448, %v974, 0
        %v984 = vsel %vm567, %v976, 0
        %986 = vmatprep.subr.bf16.mxu0 0
        %987 = vmatpush1.bf16.msra.mxu0 %v984
        %988 = vmatprep.subr.bf16.mxu0 0
        %989 = vmatpush1.bf16.msra.mxu0 0
        %990 = vmatprep.subr.bf16.mxu0 0
        %991 = vmatpush1.bf16.msra.mxu0 0
        %992 = vmatprep.subr.bf16.mxu0 0
        %993 = vmatpush1.bf16.msra.mxu0 0
        %994 = vmatprep.subr.bf16.mxu0 0
        %995 = vmatpush1.bf16.msra.mxu0 0
        %996 = vmatprep.subr.bf16.mxu0 0
        %997 = vmatpush1.bf16.msra.mxu0 0
        %998 = vmatprep.subr.bf16.mxu0 0
        %999 = vmatpush1.bf16.msra.mxu0 0
        %1000 = vmatprep.subr.bf16.mxu0 0
        %1001 = vmatpush1.bf16.msra.mxu0 0
        %1002 = vmatprep.subr.bf16.mxu0 0
        %1003 = vmatpush1.bf16.msra.mxu0 0
        %1004 = vmatprep.subr.bf16.mxu0 0
        %1005 = vmatpush1.bf16.msra.mxu0 0
        %1006 = vmatprep.subr.bf16.mxu0 0
        %1007 = vmatpush1.bf16.msra.mxu0 0
        %1008 = vmatprep.subr.bf16.mxu0 0
        %1009 = vmatpush1.bf16.msra.mxu0 0
        %1010 = vmatprep.subr.bf16.mxu0 0
        %1011 = vmatpush1.bf16.msra.mxu0 0
        %1012 = vmatprep.subr.bf16.mxu0 0
        %1013 = vmatpush1.bf16.msra.mxu0 0
        %1014 = vmatprep.subr.bf16.mxu0 0
        %1015 = vmatpush1.bf16.msra.mxu0 0
        %1016 = vmatprep.subr.bf16.mxu0 0
        %1017 = vmatpush1.bf16.msra.mxu0 0
        %1018 = vmatprep.mubr.bf16.mxu0 0
        %1019 = vmatmul.mubr.bf16.gmra.mrb[0].mxu0 %v978
        %v1020 = vpop.f32.mrb[0].mxu0
        %v1021 = vadd.f32 0.0, %v1020
        %v1022 = vpop.f32.mrb[0].mxu0
        %v1023 = vpop.f32.mrb[0].mxu0
        %v1024 = vadd.f32 0.0, %v1023
        %v1025 = vpop.f32.mrb[0].mxu0
        %1026 = vmatprep.mubr.bf16.mxu0 0
        %1027 = vmatmul.mubr.bf16.gmra.mrb[0].mxu0 %v981
        %v1028 = vpop.f32.mrb[0].mxu0
        %v1029 = vadd.f32 0.0, %v1028
        %v1030 = vpop.f32.mrb[0].mxu0
        %v1031 = vpop.f32.mrb[0].mxu0
        %v1032 = vpop.f32.mrb[0].mxu0
        %1033 = vdwg.mxu0
        %v1034 = vadd.f32 %v837, %v1021
        %v1035 = vadd.f32 %v838, %v1024
        %v1036 = vadd.f32 %v839, %v1029
        %s1037 = scalar_lea.vmem %s5, 2
        %v1038 = vld [vmem:[%s1037] sm:$0x1]
        %v1040 = vlaneseq
        %v1041 = vshrl.u32 %v1040, 7
        %v1042 = vsub.s32 0, %v1041
        %v1043 = vrot.slane %v1038, %v1042
        %v1045 = vadd.f32 %v1034, %v1043
        %v1046 = vadd.f32 %v1035, %v1043
        %v1047 = vadd.f32 %v1036, %v1043
        %s1048 = scalar_lea.vmem %s2, 24
        %v1049 = vld [vmem:[%s1048] sm:$0xf]
        %v1050 = vld [vmem:[%s1048 + $0x4] sm:$0xf]
        %v1054 = vrot.slane %v1045, 7
        %v1055 = vrot.slane %v1046, 7
        %v1056 = vsel %vm429, %v1054, %v1055
        %v1057 = vrot.slane %v1047, 7
        %v1058 = vsel %vm429, %v1055, %v1057
        %v1062 = vsel %vm429, 0.0, %v1054
        %1063 = vrot.lane.b32.xlu0 %v1045, 8
        %v1064 = vpop.permute.xlu0 %1063
        %1065 = vrot.lane.b32.xlu0 %v1046, 8
        %v1066 = vpop.permute.xlu0 %1065
        %1067 = vrot.lane.b32.xlu0 %v1047, 8
        %v1068 = vpop.permute.xlu0 %1067
        %v1072 = vsel %vm448, %v1062, %v1064
        %v1073 = vsel %vm448, %v1056, %v1066
        %v1074 = vsel %vm448, %v1058, %v1068
        %v1075 = vpack.c.bf16 %v1073, %v1072
        %v1076 = vpack.c.bf16 %v1074, %v1074
        %s1077 = scalar_lea.vmem %s3, 3
        %v1078 = vld [vmem:[%s1077] sm:$0x1]
        %v1080 = vlaneseq
        %v1081 = vshrl.u32 %v1080, 7
        %v1082 = vsub.s32 0, %v1081
        %v1083 = vrot.slane %v1078, %v1082
        %v1087 = vunpack.c.l.b16 %v1049
        %v1088 = vunpack.c.l.b16 %v1050
        %v1089 = vpack.c.b16 %v1088, %v1087
        %v1092 = vsel %vm467, %v1075, 0
        %v1095 = vsel %vm467, %v1076, 0
        %1097 = vmatprep.subr.bf16.mxu0 0
        %1098 = vmatpush1.bf16.msra.mxu0 %v1089
        %1099 = vmatprep.subr.bf16.mxu0 0
        %1100 = vmatpush1.bf16.msra.mxu0 0
        %1101 = vmatprep.subr.bf16.mxu0 0
        %1102 = vmatpush1.bf16.msra.mxu0 0
        %1103 = vmatprep.subr.bf16.mxu0 0
        %1104 = vmatpush1.bf16.msra.mxu0 0
        %1105 = vmatprep.subr.bf16.mxu0 0
        %1106 = vmatpush1.bf16.msra.mxu0 0
        %1107 = vmatprep.subr.bf16.mxu0 0
        %1108 = vmatpush1.bf16.msra.mxu0 0
        %1109 = vmatprep.subr.bf16.mxu0 0
        %1110 = vmatpush1.bf16.msra.mxu0 0
        %1111 = vmatprep.subr.bf16.mxu0 0
        %1112 = vmatpush1.bf16.msra.mxu0 0
        %1113 = vmatprep.subr.bf16.mxu0 0
        %1114 = vmatpush1.bf16.msra.mxu0 0
        %1115 = vmatprep.subr.bf16.mxu0 0
        %1116 = vmatpush1.bf16.msra.mxu0 0
        %1117 = vmatprep.subr.bf16.mxu0 0
        %1118 = vmatpush1.bf16.msra.mxu0 0
        %1119 = vmatprep.subr.bf16.mxu0 0
        %1120 = vmatpush1.bf16.msra.mxu0 0
        %1121 = vmatprep.subr.bf16.mxu0 0
        %1122 = vmatpush1.bf16.msra.mxu0 0
        %1123 = vmatprep.subr.bf16.mxu0 0
        %1124 = vmatpush1.bf16.msra.mxu0 0
        %1125 = vmatprep.subr.bf16.mxu0 0
        %1126 = vmatpush1.bf16.msra.mxu0 0
        %1127 = vmatprep.subr.bf16.mxu0 0
        %1128 = vmatpush1.bf16.msra.mxu0 0
        %1129 = vmatprep.mubr.bf16.mxu0 0
        %1130 = vmatmul.mubr.bf16.gmra.mrb[0].mxu0 %v1092
        %v1131 = vpop.f32.mrb[0].mxu0
        %v1132 = vadd.f32 %v1083, %v1131
        %v1133 = vpop.f32.mrb[0].mxu0
        %v1134 = vpop.f32.mrb[0].mxu0
        %v1135 = vadd.f32 %v1083, %v1134
        %v1136 = vpop.f32.mrb[0].mxu0
        %1137 = vmatprep.mubr.bf16.mxu0 0
        %1138 = vmatmul.mubr.bf16.gmra.mrb[0].mxu0 %v1095
        %v1139 = vpop.f32.mrb[0].mxu0
        %v1140 = vadd.f32 %v1083, %v1139
        %v1141 = vpop.f32.mrb[0].mxu0
        %v1142 = vpop.f32.mrb[0].mxu0
        %v1143 = vpop.f32.mrb[0].mxu0
        %1144 = vdwg.mxu0
        %v1145 = vtanh.pop %v1132
        %v1146 = vtanh.pop %v1135
        %v1147 = vtanh.pop %v1140
        %v1148 = vxor.u32 %v1132, 2147483648
        %v1149 = vxor.u32 %v1135, 2147483648
        %v1150 = vxor.u32 %v1140, 2147483648
        %v1151 = vmul.f32 %v1148, 1.442695
        %v1152 = vpow.pop %v1151
        %v1153 = vmul.f32 %v1149, 1.442695
        %v1154 = vpow.pop %v1153
        %v1155 = vmul.f32 %v1150, 1.442695
        %v1156 = vpow.pop %v1155
        %v1157 = vadd.f32 %v1152, 1.0
        %v1158 = vadd.f32 %v1154, 1.0
        %v1159 = vadd.f32 %v1156, 1.0
        %v1160 = vrcp.pop %v1157
        %v1161 = vmul.f32 1.0, %v1160
        %v1162 = vrcp.pop %v1158
        %v1163 = vmul.f32 1.0, %v1162
        %v1164 = vrcp.pop %v1159
        %v1165 = vmul.f32 1.0, %v1164
        %1169 = vrot.lane.b32.xlu0 %v1161, 120
        %v1170 = vpop.permute.xlu0 %1169
        %1171 = vrot.lane.b32.xlu0 %v1163, 120
        %v1172 = vpop.permute.xlu0 %1171
        %1173 = vrot.lane.b32.xlu0 %v1165, 120
        %v1174 = vpop.permute.xlu0 %1173
        %v1178 = vmul.f32 %v1145, %v1170
        %v1179 = vmul.f32 %v1146, %v1172
        %v1180 = vmul.f32 %v1147, %v1174
        %v1181 = vpack.c.bf16 %v1179, %v1178
        %v1182 = vpack.c.bf16 %v1180, %v1180
        %s1183 = scalar_lea.vmem %s4, 12
        %v1184 = vld [vmem:[%s1183] sm:$0xf]
        %v1186 = vsel %vm448, %v1181, 0
        %v1189 = vsel %vm448, %v1182, 0
        %v1192 = vsel %vm567, %v1184, 0
        %1194 = vmatprep.subr.bf16.mxu0 0
        %1195 = vmatpush1.bf16.msra.mxu0 %v1192
        %1196 = vmatprep.subr.bf16.mxu0 0
        %1197 = vmatpush1.bf16.msra.mxu0 0
        %1198 = vmatprep.subr.bf16.mxu0 0
        %1199 = vmatpush1.bf16.msra.mxu0 0
        %1200 = vmatprep.subr.bf16.mxu0 0
        %1201 = vmatpush1.bf16.msra.mxu0 0
        %1202 = vmatprep.subr.bf16.mxu0 0
        %1203 = vmatpush1.bf16.msra.mxu0 0
        %1204 = vmatprep.subr.bf16.mxu0 0
        %1205 = vmatpush1.bf16.msra.mxu0 0
        %1206 = vmatprep.subr.bf16.mxu0 0
        %1207 = vmatpush1.bf16.msra.mxu0 0
        %1208 = vmatprep.subr.bf16.mxu0 0
        %1209 = vmatpush1.bf16.msra.mxu0 0
        %1210 = vmatprep.subr.bf16.mxu0 0
        %1211 = vmatpush1.bf16.msra.mxu0 0
        %1212 = vmatprep.subr.bf16.mxu0 0
        %1213 = vmatpush1.bf16.msra.mxu0 0
        %1214 = vmatprep.subr.bf16.mxu0 0
        %1215 = vmatpush1.bf16.msra.mxu0 0
        %1216 = vmatprep.subr.bf16.mxu0 0
        %1217 = vmatpush1.bf16.msra.mxu0 0
        %1218 = vmatprep.subr.bf16.mxu0 0
        %1219 = vmatpush1.bf16.msra.mxu0 0
        %1220 = vmatprep.subr.bf16.mxu0 0
        %1221 = vmatpush1.bf16.msra.mxu0 0
        %1222 = vmatprep.subr.bf16.mxu0 0
        %1223 = vmatpush1.bf16.msra.mxu0 0
        %1224 = vmatprep.subr.bf16.mxu0 0
        %1225 = vmatpush1.bf16.msra.mxu0 0
        %1226 = vmatprep.mubr.bf16.mxu0 0
        %1227 = vmatmul.mubr.bf16.gmra.mrb[0].mxu0 %v1186
        %v1228 = vpop.f32.mrb[0].mxu0
        %v1229 = vadd.f32 0.0, %v1228
        %v1230 = vpop.f32.mrb[0].mxu0
        %v1231 = vpop.f32.mrb[0].mxu0
        %v1232 = vadd.f32 0.0, %v1231
        %v1233 = vpop.f32.mrb[0].mxu0
        %1234 = vmatprep.mubr.bf16.mxu0 0
        %1235 = vmatmul.mubr.bf16.gmra.mrb[0].mxu0 %v1189
        %v1236 = vpop.f32.mrb[0].mxu0
        %v1237 = vadd.f32 0.0, %v1236
        %v1238 = vpop.f32.mrb[0].mxu0
        %v1239 = vpop.f32.mrb[0].mxu0
        %v1240 = vpop.f32.mrb[0].mxu0
        %1241 = vdwg.mxu0
        %v1242 = vadd.f32 %v1045, %v1229
        %v1243 = vadd.f32 %v1046, %v1232
        %v1244 = vadd.f32 %v1047, %v1237
        %s1245 = scalar_lea.vmem %s5, 3
        %v1246 = vld [vmem:[%s1245] sm:$0x1]
        %v1248 = vlaneseq
        %v1249 = vshrl.u32 %v1248, 7
        %v1250 = vsub.s32 0, %v1249
        %v1251 = vrot.slane %v1246, %v1250
        %v1253 = vadd.f32 %v1242, %v1251
        %v1254 = vadd.f32 %v1243, %v1251
        %v1255 = vadd.f32 %v1244, %v1251
        %s1256 = scalar_lea.vmem %s2, 32
        %v1257 = vld [vmem:[%s1256] sm:$0xf]
        %v1258 = vld [vmem:[%s1256 + $0x4] sm:$0xf]
        %v1262 = vrot.slane %v1253, 6
        %v1263 = vrot.slane %v1254, 6
        %v1264 = vsel %vm372, %v1262, %v1263
        %v1265 = vrot.slane %v1255, 6
        %v1266 = vsel %vm372, %v1263, %v1265
        %v1270 = vsel %vm372, 0.0, %v1262
        %1271 = vrot.lane.b32.xlu0 %v1253, 8
        %v1272 = vpop.permute.xlu0 %1271
        %1273 = vrot.lane.b32.xlu0 %v1254, 8
        %v1274 = vpop.permute.xlu0 %1273
        %1275 = vrot.lane.b32.xlu0 %v1255, 8
        %v1276 = vpop.permute.xlu0 %1275
        %v1280 = vsel %vm448, %v1270, %v1272
        %v1281 = vsel %vm448, %v1264, %v1274
        %v1282 = vsel %vm448, %v1266, %v1276
        %v1283 = vpack.c.bf16 %v1281, %v1280
        %v1284 = vpack.c.bf16 %v1282, %v1282
        %s1285 = scalar_lea.vmem %s3, 4
        %v1286 = vld [vmem:[%s1285] sm:$0x1]
        %v1288 = vlaneseq
        %v1289 = vshrl.u32 %v1288, 7
        %v1290 = vsub.s32 0, %v1289
        %v1291 = vrot.slane %v1286, %v1290
        %v1295 = vunpack.c.l.b16 %v1257
        %v1296 = vunpack.c.l.b16 %v1258
        %v1297 = vpack.c.b16 %v1296, %v1295
        %v1300 = vsel %vm467, %v1283, 0
        %v1303 = vsel %vm467, %v1284, 0
        %1305 = vmatprep.subr.bf16.mxu0 0
        %1306 = vmatpush1.bf16.msra.mxu0 %v1297
        %1307 = vmatprep.subr.bf16.mxu0 0
        %1308 = vmatpush1.bf16.msra.mxu0 0
        %1309 = vmatprep.subr.bf16.mxu0 0
        %1310 = vmatpush1.bf16.msra.mxu0 0
        %1311 = vmatprep.subr.bf16.mxu0 0
        %1312 = vmatpush1.bf16.msra.mxu0 0
        %1313 = vmatprep.subr.bf16.mxu0 0
        %1314 = vmatpush1.bf16.msra.mxu0 0
        %1315 = vmatprep.subr.bf16.mxu0 0
        %1316 = vmatpush1.bf16.msra.mxu0 0
        %1317 = vmatprep.subr.bf16.mxu0 0
        %1318 = vmatpush1.bf16.msra.mxu0 0
        %1319 = vmatprep.subr.bf16.mxu0 0
        %1320 = vmatpush1.bf16.msra.mxu0 0
        %1321 = vmatprep.subr.bf16.mxu0 0
        %1322 = vmatpush1.bf16.msra.mxu0 0
        %1323 = vmatprep.subr.bf16.mxu0 0
        %1324 = vmatpush1.bf16.msra.mxu0 0
        %1325 = vmatprep.subr.bf16.mxu0 0
        %1326 = vmatpush1.bf16.msra.mxu0 0
        %1327 = vmatprep.subr.bf16.mxu0 0
        %1328 = vmatpush1.bf16.msra.mxu0 0
        %1329 = vmatprep.subr.bf16.mxu0 0
        %1330 = vmatpush1.bf16.msra.mxu0 0
        %1331 = vmatprep.subr.bf16.mxu0 0
        %1332 = vmatpush1.bf16.msra.mxu0 0
        %1333 = vmatprep.subr.bf16.mxu0 0
        %1334 = vmatpush1.bf16.msra.mxu0 0
        %1335 = vmatprep.subr.bf16.mxu0 0
        %1336 = vmatpush1.bf16.msra.mxu0 0
        %1337 = vmatprep.mubr.bf16.mxu0 0
        %1338 = vmatmul.mubr.bf16.gmra.mrb[0].mxu0 %v1300
        %v1339 = vpop.f32.mrb[0].mxu0
        %v1340 = vadd.f32 %v1291, %v1339
        %v1341 = vpop.f32.mrb[0].mxu0
        %v1342 = vpop.f32.mrb[0].mxu0
        %v1343 = vadd.f32 %v1291, %v1342
        %v1344 = vpop.f32.mrb[0].mxu0
        %1345 = vmatprep.mubr.bf16.mxu0 0
        %1346 = vmatmul.mubr.bf16.gmra.mrb[0].mxu0 %v1303
        %v1347 = vpop.f32.mrb[0].mxu0
        %v1348 = vadd.f32 %v1291, %v1347
        %v1349 = vpop.f32.mrb[0].mxu0
        %v1350 = vpop.f32.mrb[0].mxu0
        %v1351 = vpop.f32.mrb[0].mxu0
        %1352 = vdwg.mxu0
        %v1353 = vtanh.pop %v1340
        %v1354 = vtanh.pop %v1343
        %v1355 = vtanh.pop %v1348
        %v1356 = vxor.u32 %v1340, 2147483648
        %v1357 = vxor.u32 %v1343, 2147483648
        %v1358 = vxor.u32 %v1348, 2147483648
        %v1359 = vmul.f32 %v1356, 1.442695
        %v1360 = vpow.pop %v1359
        %v1361 = vmul.f32 %v1357, 1.442695
        %v1362 = vpow.pop %v1361
        %v1363 = vmul.f32 %v1358, 1.442695
        %v1364 = vpow.pop %v1363
        %v1365 = vadd.f32 %v1360, 1.0
        %v1366 = vadd.f32 %v1362, 1.0
        %v1367 = vadd.f32 %v1364, 1.0
        %v1368 = vrcp.pop %v1365
        %v1369 = vmul.f32 1.0, %v1368
        %v1370 = vrcp.pop %v1366
        %v1371 = vmul.f32 1.0, %v1370
        %v1372 = vrcp.pop %v1367
        %v1373 = vmul.f32 1.0, %v1372
        %1377 = vrot.lane.b32.xlu0 %v1369, 120
        %v1378 = vpop.permute.xlu0 %1377
        %1379 = vrot.lane.b32.xlu0 %v1371, 120
        %v1380 = vpop.permute.xlu0 %1379
        %1381 = vrot.lane.b32.xlu0 %v1373, 120
        %v1382 = vpop.permute.xlu0 %1381
        %v1386 = vmul.f32 %v1353, %v1378
        %v1387 = vmul.f32 %v1354, %v1380
        %v1388 = vmul.f32 %v1355, %v1382
        %v1389 = vpack.c.bf16 %v1387, %v1386
        %v1390 = vpack.c.bf16 %v1388, %v1388
        %s1391 = scalar_lea.vmem %s4, 16
        %v1392 = vld [vmem:[%s1391] sm:$0xf]
        %v1394 = vsel %vm448, %v1389, 0
        %v1397 = vsel %vm448, %v1390, 0
        %v1400 = vsel %vm567, %v1392, 0
        %1402 = vmatprep.subr.bf16.mxu0 0
        %1403 = vmatpush1.bf16.msra.mxu0 %v1400
        %1404 = vmatprep.subr.bf16.mxu0 0
        %1405 = vmatpush1.bf16.msra.mxu0 0
        %1406 = vmatprep.subr.bf16.mxu0 0
        %1407 = vmatpush1.bf16.msra.mxu0 0
        %1408 = vmatprep.subr.bf16.mxu0 0
        %1409 = vmatpush1.bf16.msra.mxu0 0
        %1410 = vmatprep.subr.bf16.mxu0 0
        %1411 = vmatpush1.bf16.msra.mxu0 0
        %1412 = vmatprep.subr.bf16.mxu0 0
        %1413 = vmatpush1.bf16.msra.mxu0 0
        %1414 = vmatprep.subr.bf16.mxu0 0
        %1415 = vmatpush1.bf16.msra.mxu0 0
        %1416 = vmatprep.subr.bf16.mxu0 0
        %1417 = vmatpush1.bf16.msra.mxu0 0
        %1418 = vmatprep.subr.bf16.mxu0 0
        %1419 = vmatpush1.bf16.msra.mxu0 0
        %1420 = vmatprep.subr.bf16.mxu0 0
        %1421 = vmatpush1.bf16.msra.mxu0 0
        %1422 = vmatprep.subr.bf16.mxu0 0
        %1423 = vmatpush1.bf16.msra.mxu0 0
        %1424 = vmatprep.subr.bf16.mxu0 0
        %1425 = vmatpush1.bf16.msra.mxu0 0
        %1426 = vmatprep.subr.bf16.mxu0 0
        %1427 = vmatpush1.bf16.msra.mxu0 0
        %1428 = vmatprep.subr.bf16.mxu0 0
        %1429 = vmatpush1.bf16.msra.mxu0 0
        %1430 = vmatprep.subr.bf16.mxu0 0
        %1431 = vmatpush1.bf16.msra.mxu0 0
        %1432 = vmatprep.subr.bf16.mxu0 0
        %1433 = vmatpush1.bf16.msra.mxu0 0
        %1434 = vmatprep.mubr.bf16.mxu0 0
        %1435 = vmatmul.mubr.bf16.gmra.mrb[0].mxu0 %v1394
        %v1436 = vpop.f32.mrb[0].mxu0
        %v1437 = vadd.f32 0.0, %v1436
        %v1438 = vpop.f32.mrb[0].mxu0
        %v1439 = vpop.f32.mrb[0].mxu0
        %v1440 = vadd.f32 0.0, %v1439
        %v1441 = vpop.f32.mrb[0].mxu0
        %1442 = vmatprep.mubr.bf16.mxu0 0
        %1443 = vmatmul.mubr.bf16.gmra.mrb[0].mxu0 %v1397
        %v1444 = vpop.f32.mrb[0].mxu0
        %v1445 = vadd.f32 0.0, %v1444
        %v1446 = vpop.f32.mrb[0].mxu0
        %v1447 = vpop.f32.mrb[0].mxu0
        %v1448 = vpop.f32.mrb[0].mxu0
        %1449 = vdwg.mxu0
        %v1450 = vadd.f32 %v1253, %v1437
        %v1451 = vadd.f32 %v1254, %v1440
        %v1452 = vadd.f32 %v1255, %v1445
        %s1453 = scalar_lea.vmem %s5, 4
        %v1454 = vld [vmem:[%s1453] sm:$0x1]
        %v1456 = vlaneseq
        %v1457 = vshrl.u32 %v1456, 7
        %v1458 = vsub.s32 0, %v1457
        %v1459 = vrot.slane %v1454, %v1458
        %v1461 = vadd.f32 %v1450, %v1459
        %v1462 = vadd.f32 %v1451, %v1459
        %v1463 = vadd.f32 %v1452, %v1459
        %s1464 = scalar_lea.vmem %s2, 40
        %v1465 = vld [vmem:[%s1464] sm:$0xf]
        %v1466 = vld [vmem:[%s1464 + $0x4] sm:$0xf]
        %v1470 = vrot.slane %v1461, 4
        %v1471 = vrot.slane %v1462, 4
        %v1472 = vsel %vm567, %v1470, %v1471
        %v1473 = vrot.slane %v1463, 4
        %v1474 = vsel %vm567, %v1471, %v1473
        %v1478 = vsel %vm567, 0.0, %v1470
        %1479 = vrot.lane.b32.xlu0 %v1461, 8
        %v1480 = vpop.permute.xlu0 %1479
        %1481 = vrot.lane.b32.xlu0 %v1462, 8
        %v1482 = vpop.permute.xlu0 %1481
        %1483 = vrot.lane.b32.xlu0 %v1463, 8
        %v1484 = vpop.permute.xlu0 %1483
        %v1488 = vsel %vm448, %v1478, %v1480
        %v1489 = vsel %vm448, %v1472, %v1482
        %v1490 = vsel %vm448, %v1474, %v1484
        %v1491 = vpack.c.bf16 %v1489, %v1488
        %v1492 = vpack.c.bf16 %v1490, %v1490
        %s1493 = scalar_lea.vmem %s3, 5
        %v1494 = vld [vmem:[%s1493] sm:$0x1]
        %v1496 = vlaneseq
        %v1497 = vshrl.u32 %v1496, 7
        %v1498 = vsub.s32 0, %v1497
        %v1499 = vrot.slane %v1494, %v1498
        %v1503 = vunpack.c.l.b16 %v1465
        %v1504 = vunpack.c.l.b16 %v1466
        %v1505 = vpack.c.b16 %v1504, %v1503
        %v1508 = vsel %vm467, %v1491, 0
        %v1511 = vsel %vm467, %v1492, 0
        %1513 = vmatprep.subr.bf16.mxu0 0
        %1514 = vmatpush1.bf16.msra.mxu0 %v1505
        %1515 = vmatprep.subr.bf16.mxu0 0
        %1516 = vmatpush1.bf16.msra.mxu0 0
        %1517 = vmatprep.subr.bf16.mxu0 0
        %1518 = vmatpush1.bf16.msra.mxu0 0
        %1519 = vmatprep.subr.bf16.mxu0 0
        %1520 = vmatpush1.bf16.msra.mxu0 0
        %1521 = vmatprep.subr.bf16.mxu0 0
        %1522 = vmatpush1.bf16.msra.mxu0 0
        %1523 = vmatprep.subr.bf16.mxu0 0
        %1524 = vmatpush1.bf16.msra.mxu0 0
        %1525 = vmatprep.subr.bf16.mxu0 0
        %1526 = vmatpush1.bf16.msra.mxu0 0
        %1527 = vmatprep.subr.bf16.mxu0 0
        %1528 = vmatpush1.bf16.msra.mxu0 0
        %1529 = vmatprep.subr.bf16.mxu0 0
        %1530 = vmatpush1.bf16.msra.mxu0 0
        %1531 = vmatprep.subr.bf16.mxu0 0
        %1532 = vmatpush1.bf16.msra.mxu0 0
        %1533 = vmatprep.subr.bf16.mxu0 0
        %1534 = vmatpush1.bf16.msra.mxu0 0
        %1535 = vmatprep.subr.bf16.mxu0 0
        %1536 = vmatpush1.bf16.msra.mxu0 0
        %1537 = vmatprep.subr.bf16.mxu0 0
        %1538 = vmatpush1.bf16.msra.mxu0 0
        %1539 = vmatprep.subr.bf16.mxu0 0
        %1540 = vmatpush1.bf16.msra.mxu0 0
        %1541 = vmatprep.subr.bf16.mxu0 0
        %1542 = vmatpush1.bf16.msra.mxu0 0
        %1543 = vmatprep.subr.bf16.mxu0 0
        %1544 = vmatpush1.bf16.msra.mxu0 0
        %1545 = vmatprep.mubr.bf16.mxu0 0
        %1546 = vmatmul.mubr.bf16.gmra.mrb[0].mxu0 %v1508
        %v1547 = vpop.f32.mrb[0].mxu0
        %v1548 = vpop.f32.mrb[0].mxu0
        %v1549 = vpop.f32.mrb[0].mxu0
        %v1550 = vadd.f32 %v1499, %v1549
        %v1551 = vpop.f32.mrb[0].mxu0
        %1552 = vmatprep.mubr.bf16.mxu0 0
        %1553 = vmatmul.mubr.bf16.gmra.mrb[0].mxu0 %v1511
        %v1554 = vpop.f32.mrb[0].mxu0
        %v1555 = vadd.f32 %v1499, %v1554
        %v1556 = vpop.f32.mrb[0].mxu0
        %v1557 = vpop.f32.mrb[0].mxu0
        %v1558 = vpop.f32.mrb[0].mxu0
        %1559 = vdwg.mxu0
        %v1560 = vtanh.pop %v1550
        %v1561 = vtanh.pop %v1555
        %v1562 = vxor.u32 %v1550, 2147483648
        %v1563 = vxor.u32 %v1555, 2147483648
        %v1564 = vmul.f32 %v1562, 1.442695
        %v1565 = vpow.pop %v1564
        %v1566 = vmul.f32 %v1563, 1.442695
        %v1567 = vpow.pop %v1566
        %v1568 = vadd.f32 %v1565, 1.0
        %v1569 = vadd.f32 %v1567, 1.0
        %v1570 = vrcp.pop %v1568
        %v1571 = vmul.f32 1.0, %v1570
        %v1572 = vrcp.pop %v1569
        %v1573 = vmul.f32 1.0, %v1572
        %1576 = vrot.lane.b32.xlu0 %v1571, 120
        %v1577 = vpop.permute.xlu0 %1576
        %1578 = vrot.lane.b32.xlu0 %v1573, 120
        %v1579 = vpop.permute.xlu0 %1578
        %v1582 = vmul.f32 %v1560, %v1577
        %v1583 = vmul.f32 %v1561, %v1579
        %1586 = vrot.lane.b32.xlu0 %v763, 8
        %v1587 = vpop.permute.xlu0 %1586
        %1588 = vrot.lane.b32.xlu0 %v764, 8
        %v1589 = vpop.permute.xlu0 %1588
        %1594 = vrot.lane.b32.xlu0 %v971, 16
        %v1595 = vpop.permute.xlu0 %1594
        %1596 = vrot.lane.b32.xlu0 %v972, 16
        %v1597 = vpop.permute.xlu0 %1596
        %1602 = vrot.lane.b32.xlu0 %v1179, 24
        %v1603 = vpop.permute.xlu0 %1602
        %1604 = vrot.lane.b32.xlu0 %v1180, 24
        %v1605 = vpop.permute.xlu0 %1604
        %1610 = vrot.lane.b32.xlu0 %v1387, 32
        %v1611 = vpop.permute.xlu0 %1610
        %1612 = vrot.lane.b32.xlu0 %v1388, 32
        %v1613 = vpop.permute.xlu0 %1612
        %1618 = vrot.lane.b32.xlu0 %v1582, 40
        %v1619 = vpop.permute.xlu0 %1618
        %1620 = vrot.lane.b32.xlu0 %v1583, 40
        %v1621 = vpop.permute.xlu0 %1620
        %v1624 = vsel %vm448, %v556, %v1587
        %v1625 = vsel %vm448, %v557, %v1589
        %v1626 = vsel %vm467, %v1624, %v1595
        %v1627 = vsel %vm467, %v1625, %v1597
        %vm1628 = vcmask 195584
        %v1629 = vsel %vm1628, %v1626, %v1603
        %v1630 = vsel %vm1628, %v1627, %v1605
        %vm1631 = vcmask 261120
        %v1632 = vsel %vm1631, %v1629, %v1611
        %v1633 = vsel %vm1631, %v1630, %v1613
        %vm1634 = vcmask 326656
        %v1635 = vsel %vm1634, %v1632, %v1619
        %v1636 = vsel %vm1634, %v1633, %v1621
        %v1637 = vpack.c.bf16 %v1636, %v1635
        %v1638 = vld [vmem:[%s6] sm:$0xf]
        %v1639 = vld [vmem:[%s6 + $0x4] sm:$0xf]
        %v1640 = vld [vmem:[%s6 + $0x8] sm:$0xf]
        %v1641 = vld [vmem:[%s6 + $0xc] sm:$0xf]
        %v1642 = vld [vmem:[%s6 + $0x10] sm:$0xf]
        %v1643 = vld [vmem:[%s6 + $0x14] sm:$0xf]
        %v1644 = vld [vmem:[%s7] sm:$0x1]
        %v1646 = vlaneseq
        %v1647 = vshrl.u32 %v1646, 7
        %v1648 = vsub.s32 0, %v1647
        %v1649 = vrot.slane %v1644, %v1648
        %v1652 = vshrl.u32 %v1637, 16
        %v1654 = vrot.slane %v1652, 3
        %v1655 = vshll.u32 %v1637, 16
        %v1657 = vrot.slane %v1655, 4
        %v1658 = vor.u32 %v1654, %v1657
        %v1665 = vunpack.c.l.b16 %v1638
        %v1666 = vunpack.c.l.b16 %v1639
        %v1667 = vunpack.c.l.b16 %v1640
        %v1668 = vunpack.c.l.b16 %v1641
        %v1669 = vunpack.c.l.b16 %v1642
        %v1670 = vunpack.c.l.b16 %v1643
        %v1671 = vpack.c.b16 %v1666, %v1665
        %v1672 = vpack.c.b16 %v1668, %v1667
        %v1673 = vpack.c.b16 %v1670, %v1669
        %vm1677 = vcmask 392192
        %v1679 = vsel %vm1677, %v1658, 0
        %1681 = vmatprep.subr.bf16.mxu0 0
        %1682 = vmatpush1.bf16.msra.mxu0 %v1671
        %1683 = vmatprep.subr.bf16.mxu0 0
        %1684 = vmatpush1.bf16.msra.mxu0 %v1672
        %1685 = vmatprep.subr.bf16.mxu0 0
        %1686 = vmatpush1.bf16.msra.mxu0 %v1673
        %1687 = vmatprep.subr.bf16.mxu0 0
        %1688 = vmatpush1.bf16.msra.mxu0 0
        %1689 = vmatprep.subr.bf16.mxu0 0
        %1690 = vmatpush1.bf16.msra.mxu0 0
        %1691 = vmatprep.subr.bf16.mxu0 0
        %1692 = vmatpush1.bf16.msra.mxu0 0
        %1693 = vmatprep.subr.bf16.mxu0 0
        %1694 = vmatpush1.bf16.msra.mxu0 0
        %1695 = vmatprep.subr.bf16.mxu0 0
        %1696 = vmatpush1.bf16.msra.mxu0 0
        %1697 = vmatprep.subr.bf16.mxu0 0
        %1698 = vmatpush1.bf16.msra.mxu0 0
        %1699 = vmatprep.subr.bf16.mxu0 0
        %1700 = vmatpush1.bf16.msra.mxu0 0
        %1701 = vmatprep.subr.bf16.mxu0 0
        %1702 = vmatpush1.bf16.msra.mxu0 0
        %1703 = vmatprep.subr.bf16.mxu0 0
        %1704 = vmatpush1.bf16.msra.mxu0 0
        %1705 = vmatprep.subr.bf16.mxu0 0
        %1706 = vmatpush1.bf16.msra.mxu0 0
        %1707 = vmatprep.subr.bf16.mxu0 0
        %1708 = vmatpush1.bf16.msra.mxu0 0
        %1709 = vmatprep.subr.bf16.mxu0 0
        %1710 = vmatpush1.bf16.msra.mxu0 0
        %1711 = vmatprep.subr.bf16.mxu0 0
        %1712 = vmatpush1.bf16.msra.mxu0 0
        %1713 = vmatprep.mubr.bf16.mxu0 0
        %1714 = vmatmul.mubr.bf16.gmra.mrb[0].mxu0 %v1679
        %v1715 = vpop.f32.mrb[0].mxu0
        %v1716 = vadd.f32 %v1649, %v1715
        %v1717 = vpop.f32.mrb[0].mxu0
        %v1718 = vpop.f32.mrb[0].mxu0
        %v1719 = vpop.f32.mrb[0].mxu0
        %1720 = vdwg.mxu0
        %v1721 = vmax.f32 %v1716, 0.0
        %v1722 = vpack.c.bf16 %v1721, %v1721
        %v1723 = vld [vmem:[%s8] sm:$0xf]
        %v1725 = vsel %vm448, %v1722, 0
        %v1728 = vsel %vm567, %v1723, 0
        %1730 = vmatprep.subr.bf16.mxu0 0
        %1731 = vmatpush1.bf16.msra.mxu0 %v1728
        %1732 = vmatprep.subr.bf16.mxu0 0
        %1733 = vmatpush1.bf16.msra.mxu0 0
        %1734 = vmatprep.subr.bf16.mxu0 0
        %1735 = vmatpush1.bf16.msra.mxu0 0
        %1736 = vmatprep.subr.bf16.mxu0 0
        %1737 = vmatpush1.bf16.msra.mxu0 0
        %1738 = vmatprep.subr.bf16.mxu0 0
        %1739 = vmatpush1.bf16.msra.mxu0 0
        %1740 = vmatprep.subr.bf16.mxu0 0
        %1741 = vmatpush1.bf16.msra.mxu0 0
        %1742 = vmatprep.subr.bf16.mxu0 0
        %1743 = vmatpush1.bf16.msra.mxu0 0
        %1744 = vmatprep.subr.bf16.mxu0 0
        %1745 = vmatpush1.bf16.msra.mxu0 0
        %1746 = vmatprep.subr.bf16.mxu0 0
        %1747 = vmatpush1.bf16.msra.mxu0 0
        %1748 = vmatprep.subr.bf16.mxu0 0
        %1749 = vmatpush1.bf16.msra.mxu0 0
        %1750 = vmatprep.subr.bf16.mxu0 0
        %1751 = vmatpush1.bf16.msra.mxu0 0
        %1752 = vmatprep.subr.bf16.mxu0 0
        %1753 = vmatpush1.bf16.msra.mxu0 0
        %1754 = vmatprep.subr.bf16.mxu0 0
        %1755 = vmatpush1.bf16.msra.mxu0 0
        %1756 = vmatprep.subr.bf16.mxu0 0
        %1757 = vmatpush1.bf16.msra.mxu0 0
        %1758 = vmatprep.subr.bf16.mxu0 0
        %1759 = vmatpush1.bf16.msra.mxu0 0
        %1760 = vmatprep.subr.bf16.mxu0 0
        %1761 = vmatpush1.bf16.msra.mxu0 0
        %1762 = vmatprep.mubr.bf16.mxu0 0
        %1763 = vmatmul.mubr.bf16.gmra.mrb[0].mxu0 %v1725
        %v1764 = vpop.f32.mrb[0].mxu0
        %v1765 = vadd.f32 0.0, %v1764
        %v1766 = vpop.f32.mrb[0].mxu0
        %v1767 = vpop.f32.mrb[0].mxu0
        %v1768 = vpop.f32.mrb[0].mxu0
        %1769 = vdwg.mxu0
        %v1770 = vmax.f32 %v1765, 0.0
        %v1771 = vpack.c.bf16 %v1770, %v1770
        %v1772 = vld [vmem:[%s9] sm:$0x3]
        %v1774 = vsel %vm365, %v1771, 0
        %v1777 = vsel %vm372, %v1772, 0
        %1779 = vmatprep.subr.bf16.mxu0 0
        %1780 = vmatpush1.bf16.msra.mxu0 %v1777
        %1781 = vmatprep.subr.bf16.mxu0 0
        %1782 = vmatpush1.bf16.msra.mxu0 0
        %1783 = vmatprep.subr.bf16.mxu0 0
        %1784 = vmatpush1.bf16.msra.mxu0 0
        %1785 = vmatprep.subr.bf16.mxu0 0
        %1786 = vmatpush1.bf16.msra.mxu0 0
        %1787 = vmatprep.subr.bf16.mxu0 0
        %1788 = vmatpush1.bf16.msra.mxu0 0
        %1789 = vmatprep.subr.bf16.mxu0 0
        %1790 = vmatpush1.bf16.msra.mxu0 0
        %1791 = vmatprep.subr.bf16.mxu0 0
        %1792 = vmatpush1.bf16.msra.mxu0 0
        %1793 = vmatprep.subr.bf16.mxu0 0
        %1794 = vmatpush1.bf16.msra.mxu0 0
        %1795 = vmatprep.subr.bf16.mxu0 0
        %1796 = vmatpush1.bf16.msra.mxu0 0
        %1797 = vmatprep.subr.bf16.mxu0 0
        %1798 = vmatpush1.bf16.msra.mxu0 0
        %1799 = vmatprep.subr.bf16.mxu0 0
        %1800 = vmatpush1.bf16.msra.mxu0 0
        %1801 = vmatprep.subr.bf16.mxu0 0
        %1802 = vmatpush1.bf16.msra.mxu0 0
        %1803 = vmatprep.subr.bf16.mxu0 0
        %1804 = vmatpush1.bf16.msra.mxu0 0
        %1805 = vmatprep.subr.bf16.mxu0 0
        %1806 = vmatpush1.bf16.msra.mxu0 0
        %1807 = vmatprep.subr.bf16.mxu0 0
        %1808 = vmatpush1.bf16.msra.mxu0 0
        %1809 = vmatprep.subr.bf16.mxu0 0
        %1810 = vmatpush1.bf16.msra.mxu0 0
        %1811 = vmatprep.mubr.bf16.mxu0 0
        %1812 = vmatmul.mubr.bf16.gmra.mrb[0].mxu0 %v1774
        %v1813 = vpop.f32.mrb[0].mxu0
        %v1814 = vadd.f32 0.0, %v1813
        %v1815 = vpop.f32.mrb[0].mxu0
        %v1816 = vpop.f32.mrb[0].mxu0
        %v1817 = vpop.f32.mrb[0].mxu0
        %1818 = vdwg.mxu0
        %1819 = vst [vmem:[%s352] sm:$0xff] %v1814
        %s1820 = sand.u32 %s247, 1
        %s1821 = scalar_lea.sflag [#allocation3], %s1820
        %s1822 = sand.u32 %s247, 1
        %s1823 = smul.addr %s1822, 8
        %s1824 = scalar_lea.vmem [#allocation2], %s1823
        // Predicated region
        $region61: #{tpu_custom_call.1} parent=59 // pred_check
          %p1825 = pneg %p257
        $region62: #{tpu_custom_call.1} parent=59 // pred_check_branch
          %1827 = sbr.rel (%p1825) target = $region64
        $region63: #{tpu_custom_call.1} parent=59 // pred_region
          %s1829 = ssub.s32 128, 128
          %1830 = vsyncadd %s1821, %s1829
          %s1831 = smul.addr %s24, 128
          %s1832 = scalar_lea.hbm %s10, %s1831
          %s1834 = sshll.u32 %s1824, 4
          %s1835 = int_to_ptr.vmem [resolvable:$true] %s1834
          %1837 = dma.vmem_to_hbm [thread:$0]  %s1835, 128, %s1832, %s1821
        $region64: #{tpu_custom_call.1} parent=59 // pred_fallthru
          _
      $region60: #{tpu_custom_call.1} parent=5 // pred_fallthru
        _
      %p1838 = scmp.le.s32.totalorder 2, %s19
      // Predicated region
      $region65: #{tpu_custom_call.1} parent=5 // pred_check
        %p1839 = pneg %p1838
      $region66: #{tpu_custom_call.1} parent=5 // pred_check_branch
        %1841 = sbr.rel (%p1839) target = $region68
      $region67: #{tpu_custom_call.1} parent=5 // pred_region
        %s1842 = ssub.s32 %s19, 2
        // Predicated region
        $region69: #{tpu_custom_call.1} parent=67 // pred_check
          %p1843 = pneg %p263
        $region70: #{tpu_custom_call.1} parent=67 // pred_check_branch
          %1845 = sbr.rel (%p1843) target = $region72
        $region71: #{tpu_custom_call.1} parent=67 // pred_region
          %s1846 = sand.u32 %s248, 1
          %s1847 = scalar_lea.sflag [#allocation3], %s1846
          %s1848 = sand.u32 %s248, 1
          %s1849 = smul.addr %s1848, 8
          %s1850 = scalar_lea.vmem [#allocation2], %s1849
          %1851 = dma.done %s1847, 128
        $region72: #{tpu_custom_call.1} parent=67 // pred_fallthru
          _
      $region68: #{tpu_custom_call.1} parent=5 // pred_fallthru
        _
    $region6: #{tpu_custom_call.1} parent=1 // loop_footer
      %s23 = sadd.s32 1, %s19
    $region7: #{tpu_custom_call.1} parent=1 // loop_footer_branch
      %18 = sbr.rel target = $region3
    $region8: #{tpu_custom_call.1} parent=1 // loop_exit
      _
    %1852 = vsyncpa [#allocation3], 1
    %s1853 = scalar_lea.sflag [#allocation3], 1
    %1854 = vsyncpa %s1853, 1

</llo_original>
